<compile_context>
chip_gen: v5e
topology: v5e:2x2
jax: 0.10.0
libtpu: 0.0.40
codegen_flags: <defaults>
</compile_context>

<pallas_src>
import jax
import jax.numpy as jnp
from jax.experimental import pallas as pl
from jax.experimental.pallas import tpu as pltpu


IN_FEATURES = 3 * 128 * 128   # 49152
OUT_FEATURES = 10
LANES = 128                   # TPU lane width


def _linear_vpu_kernel(x_ref, w_ref, o_ref):
    """One K-split of y = x @ W.T, computed entirely on the VPU/XLU.

    x_ref: (B, Rs, 128) f32, w_ref: (N, Rs, 128) bf16 (or f32),
    o_ref: (1, B, N) f32 partial sum for this split.
    """
    bsz = x_ref.shape[0]
    cols = [[None] * OUT_FEATURES for _ in range(bsz)]
    for n in range(OUT_FEATURES):                 # static unroll, N = 10
        w_n = w_ref[n].astype(jnp.float32)        # (Rs, 128); cast once per n
        for b in range(bsz):                      # static unroll, small B
            prod = x_ref[b] * w_n                              # (Rs, 128), VPU
            s = jnp.sum(prod, axis=0, keepdims=True)           # (1, 128)
            cols[b][n] = jnp.sum(s, axis=1, keepdims=True)     # (1, 1)
    rows = [jnp.concatenate(cols[b], axis=1) for b in range(bsz)]  # (1, N) each
    o_ref[0] = jnp.concatenate(rows, axis=0)                       # (B, N)


def classifier_forward(x_nchw, weight, bias, *, num_k_splits=2,
                       weight_dtype=jnp.bfloat16):
    """x_nchw: (B, 3, 128, 128) f32; weight: (10, 49152) f32 (PyTorch layout);
    bias: (10,) f32. Returns (B, 10) f32."""
    B = x_nchw.shape[0]
    # Flatten exactly like torch's x.reshape(x.size(0), -1) (row-major).
    x2 = x_nchw.reshape(B, -1)
    K = x2.shape[1]
    assert K == IN_FEATURES
    R = K // LANES                                # 384 rows of 128 lanes
    S = num_k_splits
    assert R % S == 0 and (R // S) % 8 == 0
    Rs = R // S

    # One-time, HBM-side layout plumbing (row-major contiguous reshapes are
    # free); weight cast to bf16 once, outside the kernel.
    x3 = x2.reshape(B, R, LANES)
    w3 = weight.astype(weight_dtype).reshape(OUT_FEATURES, R, LANES)

    cost = pl.CostEstimate(
        flops=2 * B * K * OUT_FEATURES,
        transcendentals=0,
        bytes_accessed=(B * K * 4
                        + OUT_FEATURES * K * w3.dtype.itemsize
                        + S * B * OUT_FEATURES * 4),
    )

    partials = pl.pallas_call(
        _linear_vpu_kernel,
        out_shape=jax.ShapeDtypeStruct((S, B, OUT_FEATURES), jnp.float32),
        grid_spec=pltpu.PrefetchScalarGridSpec(
            num_scalar_prefetch=0,
            grid=(S,),
            in_specs=[
                # x split: (B, Rs, 128); last two dims are (8,128)-aligned.
                pl.BlockSpec((B, Rs, LANES), lambda c: (0, c, 0)),
                # W split kept in PyTorch (N, K) order, lane-dense: (N, Rs, 128).
                pl.BlockSpec((OUT_FEATURES, Rs, LANES), lambda c: (0, c, 0)),
            ],
            # Independent partial-sum block per split -> no in-kernel
            # accumulator, and the axis can be truly "parallel" (v7x 2 TCs).
            out_specs=pl.BlockSpec((1, B, OUT_FEATURES), lambda c: (c, 0, 0)),
        ),
        compiler_params=pltpu.CompilerParams(
            dimension_semantics=("parallel",),
        ),
        cost_estimate=cost,
    )(x3, w3)

    # Tiny XLA epilogue: combine per-split partials and add the bias.
    return partials.sum(axis=0) + bias[None, :]


def init_params(key):
    """Deterministic init matching nn.Linear default: U(-1/sqrt(K), 1/sqrt(K))."""
    kw, kb = jax.random.split(key)
    bound = 1.0 / (IN_FEATURES ** 0.5)
    weight = jax.random.uniform(
        kw, (OUT_FEATURES, IN_FEATURES), jnp.float32, -bound, bound
    )
    bias = jax.random.uniform(
        kb, (OUT_FEATURES,), jnp.float32, -bound, bound
    )
    return weight, bias


if __name__ == "__main__":
    key = jax.random.PRNGKey(0)
    k_x, k_p = jax.random.split(key)

    B = 2
    x = jax.random.normal(k_x, (B, 3, 128, 128), jnp.float32)
    weight, bias = init_params(k_p)

    y = classifier_forward(x, weight, bias)
    y = jax.block_until_ready(y)
    assert y.shape == (B, OUT_FEATURES)

    x2 = x.reshape(B, -1)

    # Reference 1: same math as the kernel (bf16-rounded weight, f32 accum).
    w_bf16_f32 = weight.astype(jnp.bfloat16).astype(jnp.float32)
    y_ref_same = jnp.dot(x2, w_bf16_f32.T,
                         precision=jax.lax.Precision.HIGHEST) + bias
    assert jnp.allclose(y, y_ref_same, atol=1e-3, rtol=1e-3)

    # Reference 2: the original full-f32 nn.Linear math; bf16 weight streaming
    # introduces ~1e-3-level drift, so compare loosely (per perf review).
    y_ref_f32 = jnp.dot(x2, weight.T,
                        precision=jax.lax.Precision.HIGHEST) + bias
    assert jnp.allclose(y, y_ref_f32, atol=5e-2, rtol=5e-2)

    print("KERNEL_OK")
</pallas_src>

<mosaic_0001>
module attributes {stable_mosaic.version = 11 : i64} {
  func.func @_linear_vpu_kernel(%arg0: i32, %arg1: memref<2x192x128xf32, #tpu.memory_space<vmem>>, %arg2: memref<10x192x128xbf16, #tpu.memory_space<vmem>>, %arg3: memref<1x2x10xf32, #tpu.memory_space<vmem>>) attributes {dimension_semantics = [#tpu.dimension_semantics<parallel>], iteration_bounds = array<i64: 2>, scalar_prefetch = 0 : i64, scratch_operands = 0 : i64, tpu.core_type = #tpu.core_type<tc>, window_params = [{transform_indices = @transform_0, window_bounds = array<i64: 2, 192, 128>}, {transform_indices = @transform_1, window_bounds = array<i64: 10, 192, 128>}, {transform_indices = @transform_2, window_bounds = array<i64: 1, 2, 10>}]} {
    %c0 = arith.constant 0 : index
    %c0_0 = arith.constant 0 : index
    %c0_1 = arith.constant 0 : index
    %0 = vector.load %arg2[%c0, %c0_0, %c0_1] : memref<10x192x128xbf16, #tpu.memory_space<vmem>>, vector<1x192x128xbf16>
    %1 = vector.shape_cast %0 : vector<1x192x128xbf16> to vector<192x128xbf16>
    %2 = arith.extf %1 : vector<192x128xbf16> to vector<192x128xf32>
    %c0_2 = arith.constant 0 : index
    %c0_3 = arith.constant 0 : index
    %c0_4 = arith.constant 0 : index
    %3 = vector.load %arg1[%c0_2, %c0_3, %c0_4] : memref<2x192x128xf32, #tpu.memory_space<vmem>>, vector<1x192x128xf32>
    %4 = vector.shape_cast %3 : vector<1x192x128xf32> to vector<192x128xf32>
    %5 = arith.mulf %4, %2 : vector<192x128xf32>
    %cst = arith.constant dense<0.000000e+00> : vector<128xf32>
    %6 = vector.multi_reduction <add>, %5, %cst [0] : vector<192x128xf32> to vector<128xf32>
    %7 = vector.shape_cast %6 : vector<128xf32> to vector<1x128xf32>
    %cst_5 = arith.constant dense<0.000000e+00> : vector<1xf32>
    %8 = vector.multi_reduction <add>, %7, %cst_5 [1] : vector<1x128xf32> to vector<1xf32>
    %9 = vector.shape_cast %8 : vector<1xf32> to vector<1x1xf32>
    %c1 = arith.constant 1 : index
    %c0_6 = arith.constant 0 : index
    %c0_7 = arith.constant 0 : index
    %10 = vector.load %arg1[%c1, %c0_6, %c0_7] : memref<2x192x128xf32, #tpu.memory_space<vmem>>, vector<1x192x128xf32>
    %11 = vector.shape_cast %10 : vector<1x192x128xf32> to vector<192x128xf32>
    %12 = arith.mulf %11, %2 : vector<192x128xf32>
    %cst_8 = arith.constant dense<0.000000e+00> : vector<128xf32>
    %13 = vector.multi_reduction <add>, %12, %cst_8 [0] : vector<192x128xf32> to vector<128xf32>
    %14 = vector.shape_cast %13 : vector<128xf32> to vector<1x128xf32>
    %cst_9 = arith.constant dense<0.000000e+00> : vector<1xf32>
    %15 = vector.multi_reduction <add>, %14, %cst_9 [1] : vector<1x128xf32> to vector<1xf32>
    %16 = vector.shape_cast %15 : vector<1xf32> to vector<1x1xf32>
    %c1_10 = arith.constant 1 : index
    %c0_11 = arith.constant 0 : index
    %c0_12 = arith.constant 0 : index
    %17 = vector.load %arg2[%c1_10, %c0_11, %c0_12] : memref<10x192x128xbf16, #tpu.memory_space<vmem>>, vector<1x192x128xbf16>
    %18 = vector.shape_cast %17 : vector<1x192x128xbf16> to vector<192x128xbf16>
    %19 = arith.extf %18 : vector<192x128xbf16> to vector<192x128xf32>
    %c0_13 = arith.constant 0 : index
    %c0_14 = arith.constant 0 : index
    %c0_15 = arith.constant 0 : index
    %20 = vector.load %arg1[%c0_13, %c0_14, %c0_15] : memref<2x192x128xf32, #tpu.memory_space<vmem>>, vector<1x192x128xf32>
    %21 = vector.shape_cast %20 : vector<1x192x128xf32> to vector<192x128xf32>
    %22 = arith.mulf %21, %19 : vector<192x128xf32>
    %cst_16 = arith.constant dense<0.000000e+00> : vector<128xf32>
    %23 = vector.multi_reduction <add>, %22, %cst_16 [0] : vector<192x128xf32> to vector<128xf32>
    %24 = vector.shape_cast %23 : vector<128xf32> to vector<1x128xf32>
    %cst_17 = arith.constant dense<0.000000e+00> : vector<1xf32>
    %25 = vector.multi_reduction <add>, %24, %cst_17 [1] : vector<1x128xf32> to vector<1xf32>
    %26 = vector.shape_cast %25 : vector<1xf32> to vector<1x1xf32>
    %c1_18 = arith.constant 1 : index
    %c0_19 = arith.constant 0 : index
    %c0_20 = arith.constant 0 : index
    %27 = vector.load %arg1[%c1_18, %c0_19, %c0_20] : memref<2x192x128xf32, #tpu.memory_space<vmem>>, vector<1x192x128xf32>
    %28 = vector.shape_cast %27 : vector<1x192x128xf32> to vector<192x128xf32>
    %29 = arith.mulf %28, %19 : vector<192x128xf32>
    %cst_21 = arith.constant dense<0.000000e+00> : vector<128xf32>
    %30 = vector.multi_reduction <add>, %29, %cst_21 [0] : vector<192x128xf32> to vector<128xf32>
    %31 = vector.shape_cast %30 : vector<128xf32> to vector<1x128xf32>
    %cst_22 = arith.constant dense<0.000000e+00> : vector<1xf32>
    %32 = vector.multi_reduction <add>, %31, %cst_22 [1] : vector<1x128xf32> to vector<1xf32>
    %33 = vector.shape_cast %32 : vector<1xf32> to vector<1x1xf32>
    %c2 = arith.constant 2 : index
    %c0_23 = arith.constant 0 : index
    %c0_24 = arith.constant 0 : index
    %34 = vector.load %arg2[%c2, %c0_23, %c0_24] : memref<10x192x128xbf16, #tpu.memory_space<vmem>>, vector<1x192x128xbf16>
    %35 = vector.shape_cast %34 : vector<1x192x128xbf16> to vector<192x128xbf16>
    %36 = arith.extf %35 : vector<192x128xbf16> to vector<192x128xf32>
    %c0_25 = arith.constant 0 : index
    %c0_26 = arith.constant 0 : index
    %c0_27 = arith.constant 0 : index
    %37 = vector.load %arg1[%c0_25, %c0_26, %c0_27] : memref<2x192x128xf32, #tpu.memory_space<vmem>>, vector<1x192x128xf32>
    %38 = vector.shape_cast %37 : vector<1x192x128xf32> to vector<192x128xf32>
    %39 = arith.mulf %38, %36 : vector<192x128xf32>
    %cst_28 = arith.constant dense<0.000000e+00> : vector<128xf32>
    %40 = vector.multi_reduction <add>, %39, %cst_28 [0] : vector<192x128xf32> to vector<128xf32>
    %41 = vector.shape_cast %40 : vector<128xf32> to vector<1x128xf32>
    %cst_29 = arith.constant dense<0.000000e+00> : vector<1xf32>
    %42 = vector.multi_reduction <add>, %41, %cst_29 [1] : vector<1x128xf32> to vector<1xf32>
    %43 = vector.shape_cast %42 : vector<1xf32> to vector<1x1xf32>
    %c1_30 = arith.constant 1 : index
    %c0_31 = arith.constant 0 : index
    %c0_32 = arith.constant 0 : index
    %44 = vector.load %arg1[%c1_30, %c0_31, %c0_32] : memref<2x192x128xf32, #tpu.memory_space<vmem>>, vector<1x192x128xf32>
    %45 = vector.shape_cast %44 : vector<1x192x128xf32> to vector<192x128xf32>
    %46 = arith.mulf %45, %36 : vector<192x128xf32>
    %cst_33 = arith.constant dense<0.000000e+00> : vector<128xf32>
    %47 = vector.multi_reduction <add>, %46, %cst_33 [0] : vector<192x128xf32> to vector<128xf32>
    %48 = vector.shape_cast %47 : vector<128xf32> to vector<1x128xf32>
    %cst_34 = arith.constant dense<0.000000e+00> : vector<1xf32>
    %49 = vector.multi_reduction <add>, %48, %cst_34 [1] : vector<1x128xf32> to vector<1xf32>
    %50 = vector.shape_cast %49 : vector<1xf32> to vector<1x1xf32>
    %c3 = arith.constant 3 : index
    %c0_35 = arith.constant 0 : index
    %c0_36 = arith.constant 0 : index
    %51 = vector.load %arg2[%c3, %c0_35, %c0_36] : memref<10x192x128xbf16, #tpu.memory_space<vmem>>, vector<1x192x128xbf16>
    %52 = vector.shape_cast %51 : vector<1x192x128xbf16> to vector<192x128xbf16>
    %53 = arith.extf %52 : vector<192x128xbf16> to vector<192x128xf32>
    %c0_37 = arith.constant 0 : index
    %c0_38 = arith.constant 0 : index
    %c0_39 = arith.constant 0 : index
    %54 = vector.load %arg1[%c0_37, %c0_38, %c0_39] : memref<2x192x128xf32, #tpu.memory_space<vmem>>, vector<1x192x128xf32>
    %55 = vector.shape_cast %54 : vector<1x192x128xf32> to vector<192x128xf32>
    %56 = arith.mulf %55, %53 : vector<192x128xf32>
    %cst_40 = arith.constant dense<0.000000e+00> : vector<128xf32>
    %57 = vector.multi_reduction <add>, %56, %cst_40 [0] : vector<192x128xf32> to vector<128xf32>
    %58 = vector.shape_cast %57 : vector<128xf32> to vector<1x128xf32>
    %cst_41 = arith.constant dense<0.000000e+00> : vector<1xf32>
    %59 = vector.multi_reduction <add>, %58, %cst_41 [1] : vector<1x128xf32> to vector<1xf32>
    %60 = vector.shape_cast %59 : vector<1xf32> to vector<1x1xf32>
    %c1_42 = arith.constant 1 : index
    %c0_43 = arith.constant 0 : index
    %c0_44 = arith.constant 0 : index
    %61 = vector.load %arg1[%c1_42, %c0_43, %c0_44] : memref<2x192x128xf32, #tpu.memory_space<vmem>>, vector<1x192x128xf32>
    %62 = vector.shape_cast %61 : vector<1x192x128xf32> to vector<192x128xf32>
    %63 = arith.mulf %62, %53 : vector<192x128xf32>
    %cst_45 = arith.constant dense<0.000000e+00> : vector<128xf32>
    %64 = vector.multi_reduction <add>, %63, %cst_45 [0] : vector<192x128xf32> to vector<128xf32>
    %65 = vector.shape_cast %64 : vector<128xf32> to vector<1x128xf32>
    %cst_46 = arith.constant dense<0.000000e+00> : vector<1xf32>
    %66 = vector.multi_reduction <add>, %65, %cst_46 [1] : vector<1x128xf32> to vector<1xf32>
    %67 = vector.shape_cast %66 : vector<1xf32> to vector<1x1xf32>
    %c4 = arith.constant 4 : index
    %c0_47 = arith.constant 0 : index
    %c0_48 = arith.constant 0 : index
    %68 = vector.load %arg2[%c4, %c0_47, %c0_48] : memref<10x192x128xbf16, #tpu.memory_space<vmem>>, vector<1x192x128xbf16>
    %69 = vector.shape_cast %68 : vector<1x192x128xbf16> to vector<192x128xbf16>
    %70 = arith.extf %69 : vector<192x128xbf16> to vector<192x128xf32>
    %c0_49 = arith.constant 0 : index
    %c0_50 = arith.constant 0 : index
    %c0_51 = arith.constant 0 : index
    %71 = vector.load %arg1[%c0_49, %c0_50, %c0_51] : memref<2x192x128xf32, #tpu.memory_space<vmem>>, vector<1x192x128xf32>
    %72 = vector.shape_cast %71 : vector<1x192x128xf32> to vector<192x128xf32>
    %73 = arith.mulf %72, %70 : vector<192x128xf32>
    %cst_52 = arith.constant dense<0.000000e+00> : vector<128xf32>
    %74 = vector.multi_reduction <add>, %73, %cst_52 [0] : vector<192x128xf32> to vector<128xf32>
    %75 = vector.shape_cast %74 : vector<128xf32> to vector<1x128xf32>
    %cst_53 = arith.constant dense<0.000000e+00> : vector<1xf32>
    %76 = vector.multi_reduction <add>, %75, %cst_53 [1] : vector<1x128xf32> to vector<1xf32>
    %77 = vector.shape_cast %76 : vector<1xf32> to vector<1x1xf32>
    %c1_54 = arith.constant 1 : index
    %c0_55 = arith.constant 0 : index
    %c0_56 = arith.constant 0 : index
    %78 = vector.load %arg1[%c1_54, %c0_55, %c0_56] : memref<2x192x128xf32, #tpu.memory_space<vmem>>, vector<1x192x128xf32>
    %79 = vector.shape_cast %78 : vector<1x192x128xf32> to vector<192x128xf32>
    %80 = arith.mulf %79, %70 : vector<192x128xf32>
    %cst_57 = arith.constant dense<0.000000e+00> : vector<128xf32>
    %81 = vector.multi_reduction <add>, %80, %cst_57 [0] : vector<192x128xf32> to vector<128xf32>
    %82 = vector.shape_cast %81 : vector<128xf32> to vector<1x128xf32>
    %cst_58 = arith.constant dense<0.000000e+00> : vector<1xf32>
    %83 = vector.multi_reduction <add>, %82, %cst_58 [1] : vector<1x128xf32> to vector<1xf32>
    %84 = vector.shape_cast %83 : vector<1xf32> to vector<1x1xf32>
    %c5 = arith.constant 5 : index
    %c0_59 = arith.constant 0 : index
    %c0_60 = arith.constant 0 : index
    %85 = vector.load %arg2[%c5, %c0_59, %c0_60] : memref<10x192x128xbf16, #tpu.memory_space<vmem>>, vector<1x192x128xbf16>
    %86 = vector.shape_cast %85 : vector<1x192x128xbf16> to vector<192x128xbf16>
    %87 = arith.extf %86 : vector<192x128xbf16> to vector<192x128xf32>
    %c0_61 = arith.constant 0 : index
    %c0_62 = arith.constant 0 : index
    %c0_63 = arith.constant 0 : index
    %88 = vector.load %arg1[%c0_61, %c0_62, %c0_63] : memref<2x192x128xf32, #tpu.memory_space<vmem>>, vector<1x192x128xf32>
    %89 = vector.shape_cast %88 : vector<1x192x128xf32> to vector<192x128xf32>
    %90 = arith.mulf %89, %87 : vector<192x128xf32>
    %cst_64 = arith.constant dense<0.000000e+00> : vector<128xf32>
    %91 = vector.multi_reduction <add>, %90, %cst_64 [0] : vector<192x128xf32> to vector<128xf32>
    %92 = vector.shape_cast %91 : vector<128xf32> to vector<1x128xf32>
    %cst_65 = arith.constant dense<0.000000e+00> : vector<1xf32>
    %93 = vector.multi_reduction <add>, %92, %cst_65 [1] : vector<1x128xf32> to vector<1xf32>
    %94 = vector.shape_cast %93 : vector<1xf32> to vector<1x1xf32>
    %c1_66 = arith.constant 1 : index
    %c0_67 = arith.constant 0 : index
    %c0_68 = arith.constant 0 : index
    %95 = vector.load %arg1[%c1_66, %c0_67, %c0_68] : memref<2x192x128xf32, #tpu.memory_space<vmem>>, vector<1x192x128xf32>
    %96 = vector.shape_cast %95 : vector<1x192x128xf32> to vector<192x128xf32>
    %97 = arith.mulf %96, %87 : vector<192x128xf32>
    %cst_69 = arith.constant dense<0.000000e+00> : vector<128xf32>
    %98 = vector.multi_reduction <add>, %97, %cst_69 [0] : vector<192x128xf32> to vector<128xf32>
    %99 = vector.shape_cast %98 : vector<128xf32> to vector<1x128xf32>
    %cst_70 = arith.constant dense<0.000000e+00> : vector<1xf32>
    %100 = vector.multi_reduction <add>, %99, %cst_70 [1] : vector<1x128xf32> to vector<1xf32>
    %101 = vector.shape_cast %100 : vector<1xf32> to vector<1x1xf32>
    %c6 = arith.constant 6 : index
    %c0_71 = arith.constant 0 : index
    %c0_72 = arith.constant 0 : index
    %102 = vector.load %arg2[%c6, %c0_71, %c0_72] : memref<10x192x128xbf16, #tpu.memory_space<vmem>>, vector<1x192x128xbf16>
    %103 = vector.shape_cast %102 : vector<1x192x128xbf16> to vector<192x128xbf16>
    %104 = arith.extf %103 : vector<192x128xbf16> to vector<192x128xf32>
    %c0_73 = arith.constant 0 : index
    %c0_74 = arith.constant 0 : index
    %c0_75 = arith.constant 0 : index
    %105 = vector.load %arg1[%c0_73, %c0_74, %c0_75] : memref<2x192x128xf32, #tpu.memory_space<vmem>>, vector<1x192x128xf32>
    %106 = vector.shape_cast %105 : vector<1x192x128xf32> to vector<192x128xf32>
    %107 = arith.mulf %106, %104 : vector<192x128xf32>
    %cst_76 = arith.constant dense<0.000000e+00> : vector<128xf32>
    %108 = vector.multi_reduction <add>, %107, %cst_76 [0] : vector<192x128xf32> to vector<128xf32>
    %109 = vector.shape_cast %108 : vector<128xf32> to vector<1x128xf32>
    %cst_77 = arith.constant dense<0.000000e+00> : vector<1xf32>
    %110 = vector.multi_reduction <add>, %109, %cst_77 [1] : vector<1x128xf32> to vector<1xf32>
    %111 = vector.shape_cast %110 : vector<1xf32> to vector<1x1xf32>
    %c1_78 = arith.constant 1 : index
    %c0_79 = arith.constant 0 : index
    %c0_80 = arith.constant 0 : index
    %112 = vector.load %arg1[%c1_78, %c0_79, %c0_80] : memref<2x192x128xf32, #tpu.memory_space<vmem>>, vector<1x192x128xf32>
    %113 = vector.shape_cast %112 : vector<1x192x128xf32> to vector<192x128xf32>
    %114 = arith.mulf %113, %104 : vector<192x128xf32>
    %cst_81 = arith.constant dense<0.000000e+00> : vector<128xf32>
    %115 = vector.multi_reduction <add>, %114, %cst_81 [0] : vector<192x128xf32> to vector<128xf32>
    %116 = vector.shape_cast %115 : vector<128xf32> to vector<1x128xf32>
    %cst_82 = arith.constant dense<0.000000e+00> : vector<1xf32>
    %117 = vector.multi_reduction <add>, %116, %cst_82 [1] : vector<1x128xf32> to vector<1xf32>
    %118 = vector.shape_cast %117 : vector<1xf32> to vector<1x1xf32>
    %c7 = arith.constant 7 : index
    %c0_83 = arith.constant 0 : index
    %c0_84 = arith.constant 0 : index
    %119 = vector.load %arg2[%c7, %c0_83, %c0_84] : memref<10x192x128xbf16, #tpu.memory_space<vmem>>, vector<1x192x128xbf16>
    %120 = vector.shape_cast %119 : vector<1x192x128xbf16> to vector<192x128xbf16>
    %121 = arith.extf %120 : vector<192x128xbf16> to vector<192x128xf32>
    %c0_85 = arith.constant 0 : index
    %c0_86 = arith.constant 0 : index
    %c0_87 = arith.constant 0 : index
    %122 = vector.load %arg1[%c0_85, %c0_86, %c0_87] : memref<2x192x128xf32, #tpu.memory_space<vmem>>, vector<1x192x128xf32>
    %123 = vector.shape_cast %122 : vector<1x192x128xf32> to vector<192x128xf32>
    %124 = arith.mulf %123, %121 : vector<192x128xf32>
    %cst_88 = arith.constant dense<0.000000e+00> : vector<128xf32>
    %125 = vector.multi_reduction <add>, %124, %cst_88 [0] : vector<192x128xf32> to vector<128xf32>
    %126 = vector.shape_cast %125 : vector<128xf32> to vector<1x128xf32>
    %cst_89 = arith.constant dense<0.000000e+00> : vector<1xf32>
    %127 = vector.multi_reduction <add>, %126, %cst_89 [1] : vector<1x128xf32> to vector<1xf32>
    %128 = vector.shape_cast %127 : vector<1xf32> to vector<1x1xf32>
    %c1_90 = arith.constant 1 : index
    %c0_91 = arith.constant 0 : index
    %c0_92 = arith.constant 0 : index
    %129 = vector.load %arg1[%c1_90, %c0_91, %c0_92] : memref<2x192x128xf32, #tpu.memory_space<vmem>>, vector<1x192x128xf32>
    %130 = vector.shape_cast %129 : vector<1x192x128xf32> to vector<192x128xf32>
    %131 = arith.mulf %130, %121 : vector<192x128xf32>
    %cst_93 = arith.constant dense<0.000000e+00> : vector<128xf32>
    %132 = vector.multi_reduction <add>, %131, %cst_93 [0] : vector<192x128xf32> to vector<128xf32>
    %133 = vector.shape_cast %132 : vector<128xf32> to vector<1x128xf32>
    %cst_94 = arith.constant dense<0.000000e+00> : vector<1xf32>
    %134 = vector.multi_reduction <add>, %133, %cst_94 [1] : vector<1x128xf32> to vector<1xf32>
    %135 = vector.shape_cast %134 : vector<1xf32> to vector<1x1xf32>
    %c8 = arith.constant 8 : index
    %c0_95 = arith.constant 0 : index
    %c0_96 = arith.constant 0 : index
    %136 = vector.load %arg2[%c8, %c0_95, %c0_96] : memref<10x192x128xbf16, #tpu.memory_space<vmem>>, vector<1x192x128xbf16>
    %137 = vector.shape_cast %136 : vector<1x192x128xbf16> to vector<192x128xbf16>
    %138 = arith.extf %137 : vector<192x128xbf16> to vector<192x128xf32>
    %c0_97 = arith.constant 0 : index
    %c0_98 = arith.constant 0 : index
    %c0_99 = arith.constant 0 : index
    %139 = vector.load %arg1[%c0_97, %c0_98, %c0_99] : memref<2x192x128xf32, #tpu.memory_space<vmem>>, vector<1x192x128xf32>
    %140 = vector.shape_cast %139 : vector<1x192x128xf32> to vector<192x128xf32>
    %141 = arith.mulf %140, %138 : vector<192x128xf32>
    %cst_100 = arith.constant dense<0.000000e+00> : vector<128xf32>
    %142 = vector.multi_reduction <add>, %141, %cst_100 [0] : vector<192x128xf32> to vector<128xf32>
    %143 = vector.shape_cast %142 : vector<128xf32> to vector<1x128xf32>
    %cst_101 = arith.constant dense<0.000000e+00> : vector<1xf32>
    %144 = vector.multi_reduction <add>, %143, %cst_101 [1] : vector<1x128xf32> to vector<1xf32>
    %145 = vector.shape_cast %144 : vector<1xf32> to vector<1x1xf32>
    %c1_102 = arith.constant 1 : index
    %c0_103 = arith.constant 0 : index
    %c0_104 = arith.constant 0 : index
    %146 = vector.load %arg1[%c1_102, %c0_103, %c0_104] : memref<2x192x128xf32, #tpu.memory_space<vmem>>, vector<1x192x128xf32>
    %147 = vector.shape_cast %146 : vector<1x192x128xf32> to vector<192x128xf32>
    %148 = arith.mulf %147, %138 : vector<192x128xf32>
    %cst_105 = arith.constant dense<0.000000e+00> : vector<128xf32>
    %149 = vector.multi_reduction <add>, %148, %cst_105 [0] : vector<192x128xf32> to vector<128xf32>
    %150 = vector.shape_cast %149 : vector<128xf32> to vector<1x128xf32>
    %cst_106 = arith.constant dense<0.000000e+00> : vector<1xf32>
    %151 = vector.multi_reduction <add>, %150, %cst_106 [1] : vector<1x128xf32> to vector<1xf32>
    %152 = vector.shape_cast %151 : vector<1xf32> to vector<1x1xf32>
    %c9 = arith.constant 9 : index
    %c0_107 = arith.constant 0 : index
    %c0_108 = arith.constant 0 : index
    %153 = vector.load %arg2[%c9, %c0_107, %c0_108] : memref<10x192x128xbf16, #tpu.memory_space<vmem>>, vector<1x192x128xbf16>
    %154 = vector.shape_cast %153 : vector<1x192x128xbf16> to vector<192x128xbf16>
    %155 = arith.extf %154 : vector<192x128xbf16> to vector<192x128xf32>
    %c0_109 = arith.constant 0 : index
    %c0_110 = arith.constant 0 : index
    %c0_111 = arith.constant 0 : index
    %156 = vector.load %arg1[%c0_109, %c0_110, %c0_111] : memref<2x192x128xf32, #tpu.memory_space<vmem>>, vector<1x192x128xf32>
    %157 = vector.shape_cast %156 : vector<1x192x128xf32> to vector<192x128xf32>
    %158 = arith.mulf %157, %155 : vector<192x128xf32>
    %cst_112 = arith.constant dense<0.000000e+00> : vector<128xf32>
    %159 = vector.multi_reduction <add>, %158, %cst_112 [0] : vector<192x128xf32> to vector<128xf32>
    %160 = vector.shape_cast %159 : vector<128xf32> to vector<1x128xf32>
    %cst_113 = arith.constant dense<0.000000e+00> : vector<1xf32>
    %161 = vector.multi_reduction <add>, %160, %cst_113 [1] : vector<1x128xf32> to vector<1xf32>
    %162 = vector.shape_cast %161 : vector<1xf32> to vector<1x1xf32>
    %c1_114 = arith.constant 1 : index
    %c0_115 = arith.constant 0 : index
    %c0_116 = arith.constant 0 : index
    %163 = vector.load %arg1[%c1_114, %c0_115, %c0_116] : memref<2x192x128xf32, #tpu.memory_space<vmem>>, vector<1x192x128xf32>
    %164 = vector.shape_cast %163 : vector<1x192x128xf32> to vector<192x128xf32>
    %165 = arith.mulf %164, %155 : vector<192x128xf32>
    %cst_117 = arith.constant dense<0.000000e+00> : vector<128xf32>
    %166 = vector.multi_reduction <add>, %165, %cst_117 [0] : vector<192x128xf32> to vector<128xf32>
    %167 = vector.shape_cast %166 : vector<128xf32> to vector<1x128xf32>
    %cst_118 = arith.constant dense<0.000000e+00> : vector<1xf32>
    %168 = vector.multi_reduction <add>, %167, %cst_118 [1] : vector<1x128xf32> to vector<1xf32>
    %169 = vector.shape_cast %168 : vector<1xf32> to vector<1x1xf32>
    %170 = tpu.concatenate %9, %26, %43, %60, %77, %94, %111, %128, %145, %162 in 1 : vector<1x1xf32>, vector<1x1xf32>, vector<1x1xf32>, vector<1x1xf32>, vector<1x1xf32>, vector<1x1xf32>, vector<1x1xf32>, vector<1x1xf32>, vector<1x1xf32>, vector<1x1xf32> -> vector<1x10xf32>
    %171 = tpu.concatenate %16, %33, %50, %67, %84, %101, %118, %135, %152, %169 in 1 : vector<1x1xf32>, vector<1x1xf32>, vector<1x1xf32>, vector<1x1xf32>, vector<1x1xf32>, vector<1x1xf32>, vector<1x1xf32>, vector<1x1xf32>, vector<1x1xf32>, vector<1x1xf32> -> vector<1x10xf32>
    %172 = tpu.concatenate %170, %171 in 0 : vector<1x10xf32>, vector<1x10xf32> -> vector<2x10xf32>
    %c0_119 = arith.constant 0 : index
    %c0_120 = arith.constant 0 : index
    %c0_121 = arith.constant 0 : index
    %173 = vector.load %arg3[%c0_119, %c0_120, %c0_121] : memref<1x2x10xf32, #tpu.memory_space<vmem>>, vector<1x2x10xf32>
    %174 = vector.shape_cast %173 : vector<1x2x10xf32> to vector<2x10xf32>
    %175 = vector.shape_cast %172 : vector<2x10xf32> to vector<1x2x10xf32>
    tpu.vector_store %arg3[%c0_119, %c0_120, %c0_121], %175 {strides = array<i32>} : memref<1x2x10xf32, #tpu.memory_space<vmem>>, vector<1x2x10xf32>,
    return
  }
  func.func @transform_0(%arg0: i32) -> (i32, i32, i32) {
    %c0_i32 = arith.constant 0 : i32
    %c0_i32_0 = arith.constant 0 : i32
    %c0_i32_1 = arith.constant 0 : i32
    return %c0_i32, %arg0, %c0_i32_0 : i32, i32, i32
  }
  func.func @transform_1(%arg0: i32) -> (i32, i32, i32) {
    %c0_i32 = arith.constant 0 : i32
    %c0_i32_0 = arith.constant 0 : i32
    %c0_i32_1 = arith.constant 0 : i32
    return %c0_i32, %arg0, %c0_i32_0 : i32, i32, i32
  }
  func.func @transform_2(%arg0: i32) -> (i32, i32, i32) {
    %c0_i32 = arith.constant 0 : i32
    %c0_i32_0 = arith.constant 0 : i32
    %c0_i32_1 = arith.constant 0 : i32
    return %arg0, %c0_i32, %c0_i32_0 : i32, i32, i32
  }
}

</mosaic_0001>

<llo_original>
// kernel: tpu_custom_call.1
$region0: #{tpu_custom_call.1}
  #allocation0 [shape = 'u32[]', space=smem, size = 0x4, offset = 0x4, fixed_abs, tag = 'smem constant byte address 0x4 - core index']
  #allocation1 [shape = 'u32[72,128]{1,0:T(1,128)}', space=vmem, size = 0x9000, scoped, tag = 'internal scratch']
  #allocation8 [shape = 's32[]', space=sflag, size = 0x4, offset = 0, fixed_abs, tag = 'sflag constant byte address 0x0 - dummy sync flag']
  #allocation10 [shape = 's32[]', space=sflag, size = 0x4, offset = 0, fixed_abs, tag = 'sflag constant byte address 0x0 - dummy sync flag']
  %s0 = inlined_call_operand.hbm [shape: f32[2,384,128], index: 0, kind: input, shape index: {}]
  %s1 = inlined_call_operand.hbm [shape: bf16[10,384,128], index: 1, kind: input, shape index: {}]
  %s2 = inlined_call_operand.hbm [shape: f32[2,2,10], index: 2, kind: output, shape index: {}]
  %s3 = sld [smem:[#allocation0]]
  $region49: #{tpu_custom_call.1} parent=0
    _
  %s5 = ssub.s32 1, %s3
  %s6 = scalar_select 0, %s5, %s3
  $region1: #{tpu_custom_call.1} parent=0
    #allocation2 [shape = 'u8[393216]{0}', space=vmem, size = 0x60000, scoped, tag = 'input window, operand 0']
    #allocation3 [shape = 's32[2]{0}', space=sflag, size = 0x8, scoped, tag = 'scoped memory for tpu_custom_call.1']
    #allocation4 [shape = 's32[2]{0}', space=sflag, size = 0x8, scoped, tag = 'scoped memory for tpu_custom_call.1']
    #allocation5 [shape = 'u8[983040]{0}', space=vmem, size = 0xf0000, scoped, tag = 'input window, operand 1']
    #allocation6 [shape = 's32[2]{0}', space=sflag, size = 0x8, scoped, tag = 'scoped memory for tpu_custom_call.1']
    #allocation7 [shape = 'u8[2048]{0}', space=vmem, size = 0x800, scoped, tag = 'output window, operand 0']
    %7 = vsyncpa [#allocation3], 0
    %s8 = scalar_lea.sflag [#allocation3], 1
    %9 = vsyncpa %s8, 0
    %10 = vsyncpa [#allocation6], 0
    %s11 = scalar_lea.sflag [#allocation6], 1
    %12 = vsyncpa %s11, 0
    %13 = vsyncpa [#allocation4], 0
    %s14 = scalar_lea.sflag [#allocation4], 1
    %15 = vsyncpa %s14, 0
    loop: start=0, step=1, limit=4
    $region2: #{tpu_custom_call.1} parent=1 // loop_pre_header
      _
    $region3: #{tpu_custom_call.1} parent=1 // loop_header
      %s17 = sphi 0, %s21
      %p18 = scmp.ge.s32.totalorder %s17, 4
      %s27 = sphi 0, %s29
      %s30 = sphi 0, %s27
      %s31 = sphi 0, %s30
      %s47 = sphi 0, %s31
      %s53 = sphi 0, %s55
      %s56 = sphi 0, %s53
      %s57 = sphi 0, %s56
      %s73 = sphi 0, %s57
      %s79 = sphi 0, %s81
      %s82 = sphi 0, %s79
      %s83 = sphi 0, %s82
      %s99 = sphi 0, %s83
    $region4: #{tpu_custom_call.1} parent=1 // loop_header_branch
      %20 = sbr.rel (%p18) target = $region8
    $region5: #{tpu_custom_call.1} parent=1 // loop_body
      %s22 = ssub.s32 %s17, 1
      %s23 = ssub.s32 %s17, 2
      %s24 = sadd.s32 %s17, 1
      %s25 = ssub.s32 %s17, %s24
      %p26 = scmp.eq.s32.totalorder %s25, 0
      %s28 = sadd.s32 %s27, 1
      %s29 = scalar_select %p26, %s27, %s28
      %p32 = pneg %p26
      %p33 = scmp.eq.s32.totalorder %s17, 1
      %p34 = por %p32, %p33
      %p35 = scmp.ne.s32.totalorder %s27, %s30
      %p36 = scmp.eq.s32.totalorder %s17, 0
      %p37 = por %p35, %p36
      %p38 = scmp.ne.s32.totalorder %s27, %s30
      %p39 = scmp.eq.s32.totalorder %s22, 1
      %p40 = por %p38, %p39
      %p41 = scmp.ne.s32.totalorder %s30, %s31
      %p42 = scmp.eq.s32.totalorder %s22, 0
      %p43 = por %p41, %p42
      %p44 = scmp.ne.s32.totalorder %s30, %s31
      %p45 = scmp.eq.s32.totalorder %s23, 1
      %p46 = por %p44, %p45
      %p48 = scmp.ne.s32.totalorder %s31, %s47
      %p49 = scmp.eq.s32.totalorder %s23, 0
      %p50 = por %p48, %p49
      %s51 = ssub.s32 %s17, %s24
      %p52 = scmp.eq.s32.totalorder %s51, 0
      %s54 = sadd.s32 %s53, 1
      %s55 = scalar_select %p52, %s53, %s54
      %p58 = pneg %p52
      %p59 = scmp.eq.s32.totalorder %s17, 1
      %p60 = por %p58, %p59
      %p61 = scmp.ne.s32.totalorder %s53, %s56
      %p62 = scmp.eq.s32.totalorder %s17, 0
      %p63 = por %p61, %p62
      %p64 = scmp.ne.s32.totalorder %s53, %s56
      %p65 = scmp.eq.s32.totalorder %s22, 1
      %p66 = por %p64, %p65
      %p67 = scmp.ne.s32.totalorder %s56, %s57
      %p68 = scmp.eq.s32.totalorder %s22, 0
      %p69 = por %p67, %p68
      %p70 = scmp.ne.s32.totalorder %s56, %s57
      %p71 = scmp.eq.s32.totalorder %s23, 1
      %p72 = por %p70, %p71
      %p74 = scmp.ne.s32.totalorder %s57, %s73
      %p75 = scmp.eq.s32.totalorder %s23, 0
      %p76 = por %p74, %p75
      %s77 = ssub.s32 %s17, %s24
      %p78 = scmp.eq.s32.totalorder %s77, 0
      %s80 = sadd.s32 %s79, 1
      %s81 = scalar_select %p78, %s79, %s80
      %p84 = pneg %p78
      %p85 = scmp.eq.s32.totalorder %s17, 1
      %p86 = por %p84, %p85
      %p87 = scmp.ne.s32.totalorder %s79, %s82
      %p88 = scmp.eq.s32.totalorder %s17, 0
      %p89 = por %p87, %p88
      %p90 = scmp.ne.s32.totalorder %s79, %s82
      %p91 = scmp.eq.s32.totalorder %s22, 1
      %p92 = por %p90, %p91
      %p93 = scmp.ne.s32.totalorder %s82, %s83
      %p94 = scmp.eq.s32.totalorder %s22, 0
      %p95 = por %p93, %p94
      %p96 = scmp.ne.s32.totalorder %s82, %s83
      %p97 = scmp.eq.s32.totalorder %s23, 1
      %p98 = por %p96, %p97
      %p100 = scmp.ne.s32.totalorder %s83, %s99
      %p101 = scmp.eq.s32.totalorder %s23, 0
      %p102 = por %p100, %p101
      %p103 = scmp.le.s32.totalorder 1, %s17
      %p104 = scmp.lt.s32.totalorder %s17, 3
      %p105 = pnand %p103, %p104
      %p106 = pneg %p105
      // Predicated region
      $region9: #{tpu_custom_call.1} parent=5 // pred_check
        _
      $region10: #{tpu_custom_call.1} parent=5 // pred_check_branch
        %108 = sbr.rel (%p105) target = $region12
      $region11: #{tpu_custom_call.1} parent=5 // pred_region
        %s109 = ssub.s32 %s17, 1
      $region12: #{tpu_custom_call.1} parent=5 // pred_fallthru
        _
      %p110 = scmp.lt.s32.totalorder %s17, 2
      // Predicated region
      $region13: #{tpu_custom_call.1} parent=5 // pred_check
        %p111 = pneg %p110
      $region14: #{tpu_custom_call.1} parent=5 // pred_check_branch
        %113 = sbr.rel (%p111) target = $region16
      $region15: #{tpu_custom_call.1} parent=5 // pred_region
        // Predicated region
        $region17: #{tpu_custom_call.1} parent=15 // pred_check
          %p114 = pneg %p37
        $region18: #{tpu_custom_call.1} parent=15 // pred_check_branch
          %116 = sbr.rel (%p114) target = $region20
        $region19: #{tpu_custom_call.1} parent=15 // pred_region
          #allocation9 [shape = 'u32[6]{0}', space=smem, size = 0x18, scoped, tag = 'DMA stride descriptor']
          %s117 = sand.u32 %s27, 1
          %s118 = scalar_lea.sflag [#allocation3], %s117
          %s119 = sand.u32 %s27, 1
          %s120 = smul.addr %s119, 384
          %s121 = scalar_lea.vmem [#allocation2], %s120
          %s122 = smul.u32 24, %s17
          %124 = vsyncadd %s118, 0
          %s125 = smul.addr %s122, 8
          %s126 = scalar_lea.hbm %s0, %s125
          %s128 = sshll.u32 1, 14
          %s129 = sxor.u32 4294967295, %s128
          %s131 = sld [smem:[#allocation0]]
          %s132 = sadd.s32 2, %s131
          %s134 = sshll.u32 7, 26
          %s135 = sxor.u32 4294967295, %s134
          %s136 = sand.u32 0, %s135
          %s137 = sshll.u32 %s132, 26
          %s138 = sor.u32 %s136, %s137
          %s139 = sshll.u32 %s126, 4
          %s140 = int_to_ptr.hbm [resolvable:$true] %s139
          %s141 = sshll.u32 %s121, 4
          %s142 = int_to_ptr.vmem [resolvable:$true] %s141
          %148 = sst [smem:[#allocation9]] 6144
          %s149 = scalar_lea.smem [#allocation9], 1
          %150 = sst [smem:[%s149]] 3072
          %s151 = scalar_lea.smem [#allocation9], 2
          %152 = sst [smem:[%s151]] 24
          %s153 = scalar_lea.smem [#allocation9], 3
          %154 = sst [smem:[%s153]] 128
          %s155 = scalar_lea.smem [#allocation9], 4
          %156 = sst [smem:[%s155]] 128
          %s157 = scalar_lea.smem [#allocation9], 5
          %158 = sst [smem:[%s157]] 8
          %160 = dma.general %s140, 6144, %s142, %s118, [#allocation8], [#allocation9], %s138, 0
        $region20: #{tpu_custom_call.1} parent=15 // pred_fallthru
          _
        // Predicated region
        $region21: #{tpu_custom_call.1} parent=15 // pred_check
          %p161 = pneg %p63
        $region22: #{tpu_custom_call.1} parent=15 // pred_check_branch
          %163 = sbr.rel (%p161) target = $region24
        $region23: #{tpu_custom_call.1} parent=15 // pred_region
          #allocation11 [shape = 'u32[6]{0}', space=smem, size = 0x18, scoped, tag = 'DMA stride descriptor']
          %s164 = sand.u32 %s53, 1
          %s165 = scalar_lea.sflag [#allocation6], %s164
          %s166 = sand.u32 %s53, 1
          %s167 = smul.addr %s166, 960
          %s168 = scalar_lea.vmem [#allocation5], %s167
          %s169 = smul.u32 24, %s17
          %171 = vsyncadd %s165, 0
          %s172 = smul.addr %s169, 4
          %s173 = scalar_lea.hbm %s1, %s172
          %s175 = sshll.u32 1, 14
          %s176 = sxor.u32 4294967295, %s175
          %s178 = sld [smem:[#allocation0]]
          %s179 = sadd.s32 2, %s178
          %s181 = sshll.u32 7, 26
          %s182 = sxor.u32 4294967295, %s181
          %s183 = sand.u32 0, %s182
          %s184 = sshll.u32 %s179, 26
          %s185 = sor.u32 %s183, %s184
          %s186 = sshll.u32 %s173, 4
          %s187 = int_to_ptr.hbm [resolvable:$true] %s186
          %s188 = sshll.u32 %s168, 4
          %s189 = int_to_ptr.vmem [resolvable:$true] %s188
          %195 = sst [smem:[#allocation11]] 3072
          %s196 = scalar_lea.smem [#allocation11], 1
          %197 = sst [smem:[%s196]] 1536
          %s198 = scalar_lea.smem [#allocation11], 2
          %199 = sst [smem:[%s198]] 24
          %s200 = scalar_lea.smem [#allocation11], 3
          %201 = sst [smem:[%s200]] 64
          %s202 = scalar_lea.smem [#allocation11], 4
          %203 = sst [smem:[%s202]] 64
          %s204 = scalar_lea.smem [#allocation11], 5
          %205 = sst [smem:[%s204]] 4
          %207 = dma.general %s187, 15360, %s189, %s165, [#allocation10], [#allocation11], %s185, 0
        $region24: #{tpu_custom_call.1} parent=15 // pred_fallthru
          _
      $region16: #{tpu_custom_call.1} parent=5 // pred_fallthru
        _
      %p208 = scmp.le.s32.totalorder 1, %s17
      %p209 = scmp.lt.s32.totalorder %s17, 3
      %p210 = pnand %p208, %p209
      %p211 = pneg %p210
      // Predicated region
      $region25: #{tpu_custom_call.1} parent=5 // pred_check
        _
      $region26: #{tpu_custom_call.1} parent=5 // pred_check_branch
        %213 = sbr.rel (%p210) target = $region28
      $region27: #{tpu_custom_call.1} parent=5 // pred_region
        %s214 = ssub.s32 %s17, 1
        %s215 = sand.u32 %s30, 1
        %s216 = scalar_lea.sflag [#allocation3], %s215
        %s217 = sand.u32 %s30, 1
        %s218 = smul.addr %s217, 384
        %s219 = scalar_lea.vmem [#allocation2], %s218
        // Predicated region
        $region29: #{tpu_custom_call.1} parent=27 // pred_check
          %p220 = pneg %p43
        $region30: #{tpu_custom_call.1} parent=27 // pred_check_branch
          %222 = sbr.rel (%p220) target = $region32
        $region31: #{tpu_custom_call.1} parent=27 // pred_region
          %224 = dma.done %s216, 6144
        $region32: #{tpu_custom_call.1} parent=27 // pred_fallthru
          _
        %s225 = sand.u32 %s56, 1
        %s226 = scalar_lea.sflag [#allocation6], %s225
        %s227 = sand.u32 %s56, 1
        %s228 = smul.addr %s227, 960
        %s229 = scalar_lea.vmem [#allocation5], %s228
        // Predicated region
        $region33: #{tpu_custom_call.1} parent=27 // pred_check
          %p230 = pneg %p69
        $region34: #{tpu_custom_call.1} parent=27 // pred_check_branch
          %232 = sbr.rel (%p230) target = $region36
        $region35: #{tpu_custom_call.1} parent=27 // pred_region
          %234 = dma.done %s226, 15360
        $region36: #{tpu_custom_call.1} parent=27 // pred_fallthru
          _
        %s235 = sand.u32 %s30, 1
        %s236 = scalar_lea.sflag [#allocation3], %s235
        %s237 = sand.u32 %s30, 1
        %s238 = smul.addr %s237, 384
        %s239 = scalar_lea.vmem [#allocation2], %s238
        %p240 = pneg %p43
        %p241 = pneg %p40
        %s242 = sand.u32 %s56, 1
        %s243 = scalar_lea.sflag [#allocation6], %s242
        %s244 = sand.u32 %s56, 1
        %s245 = smul.addr %s244, 960
        %s246 = scalar_lea.vmem [#allocation5], %s245
        %p247 = pneg %p69
        %p248 = pneg %p66
        %p249 = pneg %p95
        %p250 = pneg %p92
        %s251 = sand.u32 %s82, 1
        %s252 = scalar_lea.sflag [#allocation4], %s251
        %s253 = sand.u32 %s82, 1
        %s254 = smul.addr %s253, 2
        %s255 = scalar_lea.vmem [#allocation7], %s254
        %s256 = smul.u32 24, %s22
        %s257 = smul.u32 24, %s22
        %v258 = vld [vmem:[%s229] sm:$0xf]
        %v259 = vld [vmem:[%s229 + $0x4] sm:$0xf]
        %v260 = vld [vmem:[%s229 + $0x8] sm:$0xf]
        %v261 = vld [vmem:[%s229 + $0xc] sm:$0xf]
        %v262 = vld [vmem:[%s229 + $0x10] sm:$0xf]
        %v263 = vld [vmem:[%s229 + $0x14] sm:$0xf]
        %v264 = vld [vmem:[%s229 + $0x18] sm:$0xf]
        %v265 = vld [vmem:[%s229 + $0x1c] sm:$0xf]
        %v266 = vld [vmem:[%s229 + $0x20] sm:$0xf]
        %v267 = vld [vmem:[%s229 + $0x24] sm:$0xf]
        %v268 = vld [vmem:[%s229 + $0x28] sm:$0xf]
        %v269 = vld [vmem:[%s229 + $0x2c] sm:$0xf]
        %v270 = vld [vmem:[%s229 + $0x30] sm:$0xf]
        %v271 = vld [vmem:[%s229 + $0x34] sm:$0xf]
        %v272 = vld [vmem:[%s229 + $0x38] sm:$0xf]
        %v273 = vld [vmem:[%s229 + $0x3c] sm:$0xf]
        %v274 = vld [vmem:[%s229 + $0x40] sm:$0xf]
        %v275 = vld [vmem:[%s229 + $0x44] sm:$0xf]
        %v276 = vld [vmem:[%s229 + $0x48] sm:$0xf]
        %v277 = vld [vmem:[%s229 + $0x4c] sm:$0xf]
        %v278 = vld [vmem:[%s229 + $0x50] sm:$0xf]
        %v279 = vld [vmem:[%s229 + $0x54] sm:$0xf]
        %v280 = vld [vmem:[%s229 + $0x58] sm:$0xf]
        %v281 = vld [vmem:[%s229 + $0x5c] sm:$0xf]
        %v282 = vunpack.c.l.bf16 %v258
        %v283 = vunpack.c.l.bf16 %v259
        %v284 = vunpack.c.l.bf16 %v260
        %v285 = vunpack.c.l.bf16 %v261
        %v286 = vunpack.c.l.bf16 %v262
        %v287 = vunpack.c.l.bf16 %v263
        %v288 = vunpack.c.l.bf16 %v264
        %v289 = vunpack.c.l.bf16 %v265
        %v290 = vunpack.c.l.bf16 %v266
        %v291 = vunpack.c.l.bf16 %v267
        %v292 = vunpack.c.l.bf16 %v268
        %v293 = vunpack.c.l.bf16 %v269
        %v294 = vunpack.c.l.bf16 %v270
        %v295 = vunpack.c.l.bf16 %v271
        %v296 = vunpack.c.l.bf16 %v272
        %v297 = vunpack.c.l.bf16 %v273
        %v298 = vunpack.c.l.bf16 %v274
        %v299 = vunpack.c.l.bf16 %v275
        %v300 = vunpack.c.l.bf16 %v276
        %v301 = vunpack.c.l.bf16 %v277
        %v302 = vunpack.c.l.bf16 %v278
        %v303 = vunpack.c.l.bf16 %v279
        %v304 = vunpack.c.l.bf16 %v280
        %v305 = vunpack.c.l.bf16 %v281
        %v306 = vld [vmem:[%s219] sm:$0xff]
        %v307 = vld [vmem:[%s219 + $0x8] sm:$0xff]
        %v308 = vld [vmem:[%s219 + $0x10] sm:$0xff]
        %v309 = vld [vmem:[%s219 + $0x18] sm:$0xff]
        %v310 = vld [vmem:[%s219 + $0x20] sm:$0xff]
        %v311 = vld [vmem:[%s219 + $0x28] sm:$0xff]
        %v312 = vld [vmem:[%s219 + $0x30] sm:$0xff]
        %v313 = vld [vmem:[%s219 + $0x38] sm:$0xff]
        %v314 = vld [vmem:[%s219 + $0x40] sm:$0xff]
        %v315 = vld [vmem:[%s219 + $0x48] sm:$0xff]
        %v316 = vld [vmem:[%s219 + $0x50] sm:$0xff]
        %v317 = vld [vmem:[%s219 + $0x58] sm:$0xff]
        %v318 = vld [vmem:[%s219 + $0x60] sm:$0xff]
        %v319 = vld [vmem:[%s219 + $0x68] sm:$0xff]
        %v320 = vld [vmem:[%s219 + $0x70] sm:$0xff]
        %v321 = vld [vmem:[%s219 + $0x78] sm:$0xff]
        %v322 = vld [vmem:[%s219 + $0x80] sm:$0xff]
        %v323 = vld [vmem:[%s219 + $0x88] sm:$0xff]
        %v324 = vld [vmem:[%s219 + $0x90] sm:$0xff]
        %v325 = vld [vmem:[%s219 + $0x98] sm:$0xff]
        %v326 = vld [vmem:[%s219 + $0xa0] sm:$0xff]
        %v327 = vld [vmem:[%s219 + $0xa8] sm:$0xff]
        %v328 = vld [vmem:[%s219 + $0xb0] sm:$0xff]
        %v329 = vld [vmem:[%s219 + $0xb8] sm:$0xff]
        %v330 = vmul.f32 %v306, %v282
        %v331 = vmul.f32 %v307, %v283
        %v332 = vmul.f32 %v308, %v284
        %v333 = vmul.f32 %v309, %v285
        %v334 = vmul.f32 %v310, %v286
        %v335 = vmul.f32 %v311, %v287
        %v336 = vmul.f32 %v312, %v288
        %v337 = vmul.f32 %v313, %v289
        %v338 = vmul.f32 %v314, %v290
        %v339 = vmul.f32 %v315, %v291
        %v340 = vmul.f32 %v316, %v292
        %v341 = vmul.f32 %v317, %v293
        %v342 = vmul.f32 %v318, %v294
        %v343 = vmul.f32 %v319, %v295
        %v344 = vmul.f32 %v320, %v296
        %v345 = vmul.f32 %v321, %v297
        %v346 = vmul.f32 %v322, %v298
        %v347 = vmul.f32 %v323, %v299
        %v348 = vmul.f32 %v324, %v300
        %v349 = vmul.f32 %v325, %v301
        %v350 = vmul.f32 %v326, %v302
        %v351 = vmul.f32 %v327, %v303
        %v352 = vmul.f32 %v328, %v304
        %v353 = vmul.f32 %v329, %v305
        %v354 = vadd.f32 %v330, %v331
        %v355 = vadd.f32 %v354, %v332
        %v356 = vadd.f32 %v355, %v333
        %v357 = vadd.f32 %v356, %v334
        %v358 = vadd.f32 %v357, %v335
        %v359 = vadd.f32 %v358, %v336
        %v360 = vadd.f32 %v359, %v337
        %v361 = vadd.f32 %v360, %v338
        %v362 = vadd.f32 %v361, %v339
        %v363 = vadd.f32 %v362, %v340
        %v364 = vadd.f32 %v363, %v341
        %v365 = vadd.f32 %v364, %v342
        %v366 = vadd.f32 %v365, %v343
        %v367 = vadd.f32 %v366, %v344
        %v368 = vadd.f32 %v367, %v345
        %v369 = vadd.f32 %v368, %v346
        %v370 = vadd.f32 %v369, %v347
        %v371 = vadd.f32 %v370, %v348
        %v372 = vadd.f32 %v371, %v349
        %v373 = vadd.f32 %v372, %v350
        %v374 = vadd.f32 %v373, %v351
        %v375 = vadd.f32 %v374, %v352
        %v376 = vadd.f32 %v375, %v353
        %v377 = vrot.slane %v376, 4
        %v378 = vadd.f32 %v376, %v377
        %v379 = vrot.slane %v378, 2
        %v380 = vadd.f32 %v378, %v379
        %v381 = vrot.slane %v380, 1
        %v382 = vadd.f32 %v380, %v381
        %383 = vadd.xlane.f32.xlu0 %v382
        %v384 = vpop.xlane.xlu0 %383
        %s385 = scalar_lea.vmem %s219, 192 [#allocation2]
        %v386 = vld [vmem:[%s385] sm:$0xff]
        %v387 = vld [vmem:[%s385 + $0x8] sm:$0xff]
        %v388 = vld [vmem:[%s385 + $0x10] sm:$0xff]
        %v389 = vld [vmem:[%s385 + $0x18] sm:$0xff]
        %v390 = vld [vmem:[%s385 + $0x20] sm:$0xff]
        %v391 = vld [vmem:[%s385 + $0x28] sm:$0xff]
        %v392 = vld [vmem:[%s385 + $0x30] sm:$0xff]
        %v393 = vld [vmem:[%s385 + $0x38] sm:$0xff]
        %v394 = vld [vmem:[%s385 + $0x40] sm:$0xff]
        %v395 = vld [vmem:[%s385 + $0x48] sm:$0xff]
        %v396 = vld [vmem:[%s385 + $0x50] sm:$0xff]
        %v397 = vld [vmem:[%s385 + $0x58] sm:$0xff]
        %v398 = vld [vmem:[%s385 + $0x60] sm:$0xff]
        %v399 = vld [vmem:[%s385 + $0x68] sm:$0xff]
        %v400 = vld [vmem:[%s385 + $0x70] sm:$0xff]
        %v401 = vld [vmem:[%s385 + $0x78] sm:$0xff]
        %v402 = vld [vmem:[%s385 + $0x80] sm:$0xff]
        %v403 = vld [vmem:[%s385 + $0x88] sm:$0xff]
        %v404 = vld [vmem:[%s385 + $0x90] sm:$0xff]
        %v405 = vld [vmem:[%s385 + $0x98] sm:$0xff]
        %v406 = vld [vmem:[%s385 + $0xa0] sm:$0xff]
        %v407 = vld [vmem:[%s385 + $0xa8] sm:$0xff]
        %v408 = vld [vmem:[%s385 + $0xb0] sm:$0xff]
        %v409 = vld [vmem:[%s385 + $0xb8] sm:$0xff]
        %v410 = vmul.f32 %v386, %v282
        %v411 = vmul.f32 %v387, %v283
        %v412 = vmul.f32 %v388, %v284
        %v413 = vmul.f32 %v389, %v285
        %v414 = vmul.f32 %v390, %v286
        %v415 = vmul.f32 %v391, %v287
        %v416 = vmul.f32 %v392, %v288
        %v417 = vmul.f32 %v393, %v289
        %v418 = vmul.f32 %v394, %v290
        %v419 = vmul.f32 %v395, %v291
        %v420 = vmul.f32 %v396, %v292
        %v421 = vmul.f32 %v397, %v293
        %v422 = vmul.f32 %v398, %v294
        %v423 = vmul.f32 %v399, %v295
        %v424 = vmul.f32 %v400, %v296
        %v425 = vmul.f32 %v401, %v297
        %v426 = vmul.f32 %v402, %v298
        %v427 = vmul.f32 %v403, %v299
        %v428 = vmul.f32 %v404, %v300
        %v429 = vmul.f32 %v405, %v301
        %v430 = vmul.f32 %v406, %v302
        %v431 = vmul.f32 %v407, %v303
        %v432 = vmul.f32 %v408, %v304
        %v433 = vmul.f32 %v409, %v305
        %v434 = vadd.f32 %v410, %v411
        %v435 = vadd.f32 %v434, %v412
        %v436 = vadd.f32 %v435, %v413
        %v437 = vadd.f32 %v436, %v414
        %v438 = vadd.f32 %v437, %v415
        %v439 = vadd.f32 %v438, %v416
        %v440 = vadd.f32 %v439, %v417
        %v441 = vadd.f32 %v440, %v418
        %v442 = vadd.f32 %v441, %v419
        %v443 = vadd.f32 %v442, %v420
        %v444 = vadd.f32 %v443, %v421
        %v445 = vadd.f32 %v444, %v422
        %v446 = vadd.f32 %v445, %v423
        %v447 = vadd.f32 %v446, %v424
        %v448 = vadd.f32 %v447, %v425
        %v449 = vadd.f32 %v448, %v426
        %v450 = vadd.f32 %v449, %v427
        %v451 = vadd.f32 %v450, %v428
        %v452 = vadd.f32 %v451, %v429
        %v453 = vadd.f32 %v452, %v430
        %v454 = vadd.f32 %v453, %v431
        %v455 = vadd.f32 %v454, %v432
        %v456 = vadd.f32 %v455, %v433
        %v457 = vrot.slane %v456, 4
        %v458 = vadd.f32 %v456, %v457
        %v459 = vrot.slane %v458, 2
        %v460 = vadd.f32 %v458, %v459
        %v461 = vrot.slane %v460, 1
        %v462 = vadd.f32 %v460, %v461
        %463 = vadd.xlane.f32.xlu0 %v462
        %v464 = vpop.xlane.xlu0 %463
        %s465 = scalar_lea.vmem %s229, 96 [#allocation5]
        %v466 = vld [vmem:[%s465] sm:$0xf]
        %v467 = vld [vmem:[%s465 + $0x4] sm:$0xf]
        %v468 = vld [vmem:[%s465 + $0x8] sm:$0xf]
        %v469 = vld [vmem:[%s465 + $0xc] sm:$0xf]
        %v470 = vld [vmem:[%s465 + $0x10] sm:$0xf]
        %v471 = vld [vmem:[%s465 + $0x14] sm:$0xf]
        %v472 = vld [vmem:[%s465 + $0x18] sm:$0xf]
        %v473 = vld [vmem:[%s465 + $0x1c] sm:$0xf]
        %v474 = vld [vmem:[%s465 + $0x20] sm:$0xf]
        %v475 = vld [vmem:[%s465 + $0x24] sm:$0xf]
        %v476 = vld [vmem:[%s465 + $0x28] sm:$0xf]
        %v477 = vld [vmem:[%s465 + $0x2c] sm:$0xf]
        %v478 = vld [vmem:[%s465 + $0x30] sm:$0xf]
        %v479 = vld [vmem:[%s465 + $0x34] sm:$0xf]
        %v480 = vld [vmem:[%s465 + $0x38] sm:$0xf]
        %v481 = vld [vmem:[%s465 + $0x3c] sm:$0xf]
        %v482 = vld [vmem:[%s465 + $0x40] sm:$0xf]
        %v483 = vld [vmem:[%s465 + $0x44] sm:$0xf]
        %v484 = vld [vmem:[%s465 + $0x48] sm:$0xf]
        %v485 = vld [vmem:[%s465 + $0x4c] sm:$0xf]
        %v486 = vld [vmem:[%s465 + $0x50] sm:$0xf]
        %v487 = vld [vmem:[%s465 + $0x54] sm:$0xf]
        %v488 = vld [vmem:[%s465 + $0x58] sm:$0xf]
        %v489 = vld [vmem:[%s465 + $0x5c] sm:$0xf]
        %v490 = vunpack.c.l.bf16 %v466
        %v491 = vunpack.c.l.bf16 %v467
        %v492 = vunpack.c.l.bf16 %v468
        %v493 = vunpack.c.l.bf16 %v469
        %v494 = vunpack.c.l.bf16 %v470
        %v495 = vunpack.c.l.bf16 %v471
        %v496 = vunpack.c.l.bf16 %v472
        %v497 = vunpack.c.l.bf16 %v473
        %v498 = vunpack.c.l.bf16 %v474
        %v499 = vunpack.c.l.bf16 %v475
        %v500 = vunpack.c.l.bf16 %v476
        %v501 = vunpack.c.l.bf16 %v477
        %v502 = vunpack.c.l.bf16 %v478
        %v503 = vunpack.c.l.bf16 %v479
        %v504 = vunpack.c.l.bf16 %v480
        %v505 = vunpack.c.l.bf16 %v481
        %v506 = vunpack.c.l.bf16 %v482
        %v507 = vunpack.c.l.bf16 %v483
        %v508 = vunpack.c.l.bf16 %v484
        %v509 = vunpack.c.l.bf16 %v485
        %v510 = vunpack.c.l.bf16 %v486
        %v511 = vunpack.c.l.bf16 %v487
        %v512 = vunpack.c.l.bf16 %v488
        %v513 = vunpack.c.l.bf16 %v489
        %v514 = vmul.f32 %v306, %v490
        %v515 = vmul.f32 %v307, %v491
        %v516 = vmul.f32 %v308, %v492
        %v517 = vmul.f32 %v309, %v493
        %v518 = vmul.f32 %v310, %v494
        %v519 = vmul.f32 %v311, %v495
        %v520 = vmul.f32 %v312, %v496
        %v521 = vmul.f32 %v313, %v497
        %v522 = vmul.f32 %v314, %v498
        %v523 = vmul.f32 %v315, %v499
        %v524 = vmul.f32 %v316, %v500
        %v525 = vmul.f32 %v317, %v501
        %v526 = vmul.f32 %v318, %v502
        %v527 = vmul.f32 %v319, %v503
        %v528 = vmul.f32 %v320, %v504
        %v529 = vmul.f32 %v321, %v505
        %v530 = vmul.f32 %v322, %v506
        %v531 = vmul.f32 %v323, %v507
        %v532 = vmul.f32 %v324, %v508
        %v533 = vmul.f32 %v325, %v509
        %v534 = vmul.f32 %v326, %v510
        %v535 = vmul.f32 %v327, %v511
        %v536 = vmul.f32 %v328, %v512
        %v537 = vmul.f32 %v329, %v513
        %v538 = vadd.f32 %v514, %v515
        %v539 = vadd.f32 %v538, %v516
        %v540 = vadd.f32 %v539, %v517
        %v541 = vadd.f32 %v540, %v518
        %v542 = vadd.f32 %v541, %v519
        %v543 = vadd.f32 %v542, %v520
        %v544 = vadd.f32 %v543, %v521
        %v545 = vadd.f32 %v544, %v522
        %v546 = vadd.f32 %v545, %v523
        %v547 = vadd.f32 %v546, %v524
        %v548 = vadd.f32 %v547, %v525
        %v549 = vadd.f32 %v548, %v526
        %v550 = vadd.f32 %v549, %v527
        %v551 = vadd.f32 %v550, %v528
        %v552 = vadd.f32 %v551, %v529
        %v553 = vadd.f32 %v552, %v530
        %v554 = vadd.f32 %v553, %v531
        %v555 = vadd.f32 %v554, %v532
        %v556 = vadd.f32 %v555, %v533
        %v557 = vadd.f32 %v556, %v534
        %v558 = vadd.f32 %v557, %v535
        %v559 = vadd.f32 %v558, %v536
        %v560 = vadd.f32 %v559, %v537
        %v561 = vrot.slane %v560, 4
        %v562 = vadd.f32 %v560, %v561
        %v563 = vrot.slane %v562, 2
        %v564 = vadd.f32 %v562, %v563
        %v565 = vrot.slane %v564, 1
        %v566 = vadd.f32 %v564, %v565
        %567 = vadd.xlane.f32.xlu0 %v566
        %v568 = vpop.xlane.xlu0 %567
        %v569 = vmul.f32 %v386, %v490
        %v570 = vmul.f32 %v387, %v491
        %v571 = vmul.f32 %v388, %v492
        %v572 = vmul.f32 %v389, %v493
        %v573 = vmul.f32 %v390, %v494
        %v574 = vmul.f32 %v391, %v495
        %v575 = vmul.f32 %v392, %v496
        %v576 = vmul.f32 %v393, %v497
        %v577 = vmul.f32 %v394, %v498
        %v578 = vmul.f32 %v395, %v499
        %v579 = vmul.f32 %v396, %v500
        %v580 = vmul.f32 %v397, %v501
        %v581 = vmul.f32 %v398, %v502
        %v582 = vmul.f32 %v399, %v503
        %v583 = vmul.f32 %v400, %v504
        %v584 = vmul.f32 %v401, %v505
        %v585 = vmul.f32 %v402, %v506
        %v586 = vmul.f32 %v403, %v507
        %v587 = vmul.f32 %v404, %v508
        %v588 = vmul.f32 %v405, %v509
        %v589 = vmul.f32 %v406, %v510
        %v590 = vmul.f32 %v407, %v511
        %v591 = vmul.f32 %v408, %v512
        %v592 = vmul.f32 %v409, %v513
        %v593 = vadd.f32 %v569, %v570
        %v594 = vadd.f32 %v593, %v571
        %v595 = vadd.f32 %v594, %v572
        %v596 = vadd.f32 %v595, %v573
        %v597 = vadd.f32 %v596, %v574
        %v598 = vadd.f32 %v597, %v575
        %v599 = vadd.f32 %v598, %v576
        %v600 = vadd.f32 %v599, %v577
        %v601 = vadd.f32 %v600, %v578
        %v602 = vadd.f32 %v601, %v579
        %v603 = vadd.f32 %v602, %v580
        %v604 = vadd.f32 %v603, %v581
        %v605 = vadd.f32 %v604, %v582
        %v606 = vadd.f32 %v605, %v583
        %v607 = vadd.f32 %v606, %v584
        %v608 = vadd.f32 %v607, %v585
        %v609 = vadd.f32 %v608, %v586
        %v610 = vadd.f32 %v609, %v587
        %v611 = vadd.f32 %v610, %v588
        %v612 = vadd.f32 %v611, %v589
        %v613 = vadd.f32 %v612, %v590
        %v614 = vadd.f32 %v613, %v591
        %v615 = vadd.f32 %v614, %v592
        %v616 = vrot.slane %v615, 4
        %v617 = vadd.f32 %v615, %v616
        %v618 = vrot.slane %v617, 2
        %v619 = vadd.f32 %v617, %v618
        %v620 = vrot.slane %v619, 1
        %v621 = vadd.f32 %v619, %v620
        %622 = vadd.xlane.f32.xlu0 %v621
        %v623 = vpop.xlane.xlu0 %622
        %s624 = scalar_lea.vmem %s229, 192 [#allocation5]
        %v625 = vld [vmem:[%s624] sm:$0xf]
        %v626 = vld [vmem:[%s624 + $0x4] sm:$0xf]
        %v627 = vld [vmem:[%s624 + $0x8] sm:$0xf]
        %v628 = vld [vmem:[%s624 + $0xc] sm:$0xf]
        %v629 = vld [vmem:[%s624 + $0x10] sm:$0xf]
        %v630 = vld [vmem:[%s624 + $0x14] sm:$0xf]
        %v631 = vld [vmem:[%s624 + $0x18] sm:$0xf]
        %v632 = vld [vmem:[%s624 + $0x1c] sm:$0xf]
        %v633 = vld [vmem:[%s624 + $0x20] sm:$0xf]
        %v634 = vld [vmem:[%s624 + $0x24] sm:$0xf]
        %v635 = vld [vmem:[%s624 + $0x28] sm:$0xf]
        %v636 = vld [vmem:[%s624 + $0x2c] sm:$0xf]
        %v637 = vld [vmem:[%s624 + $0x30] sm:$0xf]
        %v638 = vld [vmem:[%s624 + $0x34] sm:$0xf]
        %v639 = vld [vmem:[%s624 + $0x38] sm:$0xf]
        %v640 = vld [vmem:[%s624 + $0x3c] sm:$0xf]
        %v641 = vld [vmem:[%s624 + $0x40] sm:$0xf]
        %v642 = vld [vmem:[%s624 + $0x44] sm:$0xf]
        %v643 = vld [vmem:[%s624 + $0x48] sm:$0xf]
        %v644 = vld [vmem:[%s624 + $0x4c] sm:$0xf]
        %v645 = vld [vmem:[%s624 + $0x50] sm:$0xf]
        %v646 = vld [vmem:[%s624 + $0x54] sm:$0xf]
        %v647 = vld [vmem:[%s624 + $0x58] sm:$0xf]
        %v648 = vld [vmem:[%s624 + $0x5c] sm:$0xf]
        %v649 = vunpack.c.l.bf16 %v625
        %v650 = vunpack.c.l.bf16 %v626
        %v651 = vunpack.c.l.bf16 %v627
        %v652 = vunpack.c.l.bf16 %v628
        %v653 = vunpack.c.l.bf16 %v629
        %v654 = vunpack.c.l.bf16 %v630
        %v655 = vunpack.c.l.bf16 %v631
        %v656 = vunpack.c.l.bf16 %v632
        %v657 = vunpack.c.l.bf16 %v633
        %v658 = vunpack.c.l.bf16 %v634
        %v659 = vunpack.c.l.bf16 %v635
        %v660 = vunpack.c.l.bf16 %v636
        %v661 = vunpack.c.l.bf16 %v637
        %v662 = vunpack.c.l.bf16 %v638
        %v663 = vunpack.c.l.bf16 %v639
        %v664 = vunpack.c.l.bf16 %v640
        %v665 = vunpack.c.l.bf16 %v641
        %v666 = vunpack.c.l.bf16 %v642
        %v667 = vunpack.c.l.bf16 %v643
        %v668 = vunpack.c.l.bf16 %v644
        %v669 = vunpack.c.l.bf16 %v645
        %v670 = vunpack.c.l.bf16 %v646
        %v671 = vunpack.c.l.bf16 %v647
        %v672 = vunpack.c.l.bf16 %v648
        %v673 = vmul.f32 %v306, %v649
        %v674 = vmul.f32 %v307, %v650
        %v675 = vmul.f32 %v308, %v651
        %v676 = vmul.f32 %v309, %v652
        %v677 = vmul.f32 %v310, %v653
        %v678 = vmul.f32 %v311, %v654
        %v679 = vmul.f32 %v312, %v655
        %v680 = vmul.f32 %v313, %v656
        %v681 = vmul.f32 %v314, %v657
        %v682 = vmul.f32 %v315, %v658
        %v683 = vmul.f32 %v316, %v659
        %v684 = vmul.f32 %v317, %v660
        %v685 = vmul.f32 %v318, %v661
        %v686 = vmul.f32 %v319, %v662
        %v687 = vmul.f32 %v320, %v663
        %v688 = vmul.f32 %v321, %v664
        %v689 = vmul.f32 %v322, %v665
        %v690 = vmul.f32 %v323, %v666
        %v691 = vmul.f32 %v324, %v667
        %v692 = vmul.f32 %v325, %v668
        %v693 = vmul.f32 %v326, %v669
        %v694 = vmul.f32 %v327, %v670
        %v695 = vmul.f32 %v328, %v671
        %v696 = vmul.f32 %v329, %v672
        %v697 = vadd.f32 %v673, %v674
        %v698 = vadd.f32 %v697, %v675
        %v699 = vadd.f32 %v698, %v676
        %v700 = vadd.f32 %v699, %v677
        %v701 = vadd.f32 %v700, %v678
        %v702 = vadd.f32 %v701, %v679
        %v703 = vadd.f32 %v702, %v680
        %v704 = vadd.f32 %v703, %v681
        %v705 = vadd.f32 %v704, %v682
        %v706 = vadd.f32 %v705, %v683
        %v707 = vadd.f32 %v706, %v684
        %v708 = vadd.f32 %v707, %v685
        %v709 = vadd.f32 %v708, %v686
        %v710 = vadd.f32 %v709, %v687
        %v711 = vadd.f32 %v710, %v688
        %v712 = vadd.f32 %v711, %v689
        %v713 = vadd.f32 %v712, %v690
        %v714 = vadd.f32 %v713, %v691
        %v715 = vadd.f32 %v714, %v692
        %v716 = vadd.f32 %v715, %v693
        %v717 = vadd.f32 %v716, %v694
        %v718 = vadd.f32 %v717, %v695
        %v719 = vadd.f32 %v718, %v696
        %v720 = vrot.slane %v719, 4
        %v721 = vadd.f32 %v719, %v720
        %v722 = vrot.slane %v721, 2
        %v723 = vadd.f32 %v721, %v722
        %v724 = vrot.slane %v723, 1
        %v725 = vadd.f32 %v723, %v724
        %726 = vadd.xlane.f32.xlu0 %v725
        %v727 = vpop.xlane.xlu0 %726
        %v728 = vmul.f32 %v386, %v649
        %v729 = vmul.f32 %v387, %v650
        %v730 = vmul.f32 %v388, %v651
        %v731 = vmul.f32 %v389, %v652
        %v732 = vmul.f32 %v390, %v653
        %v733 = vmul.f32 %v391, %v654
        %v734 = vmul.f32 %v392, %v655
        %v735 = vmul.f32 %v393, %v656
        %v736 = vmul.f32 %v394, %v657
        %v737 = vmul.f32 %v395, %v658
        %v738 = vmul.f32 %v396, %v659
        %v739 = vmul.f32 %v397, %v660
        %v740 = vmul.f32 %v398, %v661
        %v741 = vmul.f32 %v399, %v662
        %v742 = vmul.f32 %v400, %v663
        %v743 = vmul.f32 %v401, %v664
        %v744 = vmul.f32 %v402, %v665
        %v745 = vmul.f32 %v403, %v666
        %v746 = vmul.f32 %v404, %v667
        %v747 = vmul.f32 %v405, %v668
        %v748 = vmul.f32 %v406, %v669
        %v749 = vmul.f32 %v407, %v670
        %v750 = vmul.f32 %v408, %v671
        %v751 = vmul.f32 %v409, %v672
        %v752 = vadd.f32 %v728, %v729
        %v753 = vadd.f32 %v752, %v730
        %v754 = vadd.f32 %v753, %v731
        %v755 = vadd.f32 %v754, %v732
        %v756 = vadd.f32 %v755, %v733
        %v757 = vadd.f32 %v756, %v734
        %v758 = vadd.f32 %v757, %v735
        %v759 = vadd.f32 %v758, %v736
        %v760 = vadd.f32 %v759, %v737
        %v761 = vadd.f32 %v760, %v738
        %v762 = vadd.f32 %v761, %v739
        %v763 = vadd.f32 %v762, %v740
        %v764 = vadd.f32 %v763, %v741
        %v765 = vadd.f32 %v764, %v742
        %v766 = vadd.f32 %v765, %v743
        %v767 = vadd.f32 %v766, %v744
        %v768 = vadd.f32 %v767, %v745
        %v769 = vadd.f32 %v768, %v746
        %v770 = vadd.f32 %v769, %v747
        %v771 = vadd.f32 %v770, %v748
        %v772 = vadd.f32 %v771, %v749
        %v773 = vadd.f32 %v772, %v750
        %v774 = vadd.f32 %v773, %v751
        %v775 = vrot.slane %v774, 4
        %v776 = vadd.f32 %v774, %v775
        %v777 = vrot.slane %v776, 2
        %v778 = vadd.f32 %v776, %v777
        %v779 = vrot.slane %v778, 1
        %v780 = vadd.f32 %v778, %v779
        %781 = vadd.xlane.f32.xlu0 %v780
        %v782 = vpop.xlane.xlu0 %781
        %s783 = scalar_lea.vmem %s229, 288 [#allocation5]
        %v784 = vld [vmem:[%s783] sm:$0xf]
        %v785 = vld [vmem:[%s783 + $0x4] sm:$0xf]
        %v786 = vld [vmem:[%s783 + $0x8] sm:$0xf]
        %v787 = vld [vmem:[%s783 + $0xc] sm:$0xf]
        %v788 = vld [vmem:[%s783 + $0x10] sm:$0xf]
        %v789 = vld [vmem:[%s783 + $0x14] sm:$0xf]
        %v790 = vld [vmem:[%s783 + $0x18] sm:$0xf]
        %v791 = vld [vmem:[%s783 + $0x1c] sm:$0xf]
        %v792 = vld [vmem:[%s783 + $0x20] sm:$0xf]
        %v793 = vld [vmem:[%s783 + $0x24] sm:$0xf]
        %v794 = vld [vmem:[%s783 + $0x28] sm:$0xf]
        %v795 = vld [vmem:[%s783 + $0x2c] sm:$0xf]
        %v796 = vld [vmem:[%s783 + $0x30] sm:$0xf]
        %v797 = vld [vmem:[%s783 + $0x34] sm:$0xf]
        %v798 = vld [vmem:[%s783 + $0x38] sm:$0xf]
        %v799 = vld [vmem:[%s783 + $0x3c] sm:$0xf]
        %v800 = vld [vmem:[%s783 + $0x40] sm:$0xf]
        %v801 = vld [vmem:[%s783 + $0x44] sm:$0xf]
        %v802 = vld [vmem:[%s783 + $0x48] sm:$0xf]
        %v803 = vld [vmem:[%s783 + $0x4c] sm:$0xf]
        %v804 = vld [vmem:[%s783 + $0x50] sm:$0xf]
        %v805 = vld [vmem:[%s783 + $0x54] sm:$0xf]
        %v806 = vld [vmem:[%s783 + $0x58] sm:$0xf]
        %v807 = vld [vmem:[%s783 + $0x5c] sm:$0xf]
        %v808 = vunpack.c.l.bf16 %v784
        %v809 = vunpack.c.l.bf16 %v785
        %v810 = vunpack.c.l.bf16 %v786
        %v811 = vunpack.c.l.bf16 %v787
        %v812 = vunpack.c.l.bf16 %v788
        %v813 = vunpack.c.l.bf16 %v789
        %v814 = vunpack.c.l.bf16 %v790
        %v815 = vunpack.c.l.bf16 %v791
        %v816 = vunpack.c.l.bf16 %v792
        %v817 = vunpack.c.l.bf16 %v793
        %v818 = vunpack.c.l.bf16 %v794
        %v819 = vunpack.c.l.bf16 %v795
        %v820 = vunpack.c.l.bf16 %v796
        %v821 = vunpack.c.l.bf16 %v797
        %v822 = vunpack.c.l.bf16 %v798
        %v823 = vunpack.c.l.bf16 %v799
        %v824 = vunpack.c.l.bf16 %v800
        %v825 = vunpack.c.l.bf16 %v801
        %v826 = vunpack.c.l.bf16 %v802
        %v827 = vunpack.c.l.bf16 %v803
        %v828 = vunpack.c.l.bf16 %v804
        %v829 = vunpack.c.l.bf16 %v805
        %v830 = vunpack.c.l.bf16 %v806
        %v831 = vunpack.c.l.bf16 %v807
        %v832 = vmul.f32 %v306, %v808
        %v833 = vmul.f32 %v307, %v809
        %v834 = vmul.f32 %v308, %v810
        %v835 = vmul.f32 %v309, %v811
        %v836 = vmul.f32 %v310, %v812
        %v837 = vmul.f32 %v311, %v813
        %v838 = vmul.f32 %v312, %v814
        %v839 = vmul.f32 %v313, %v815
        %v840 = vmul.f32 %v314, %v816
        %v841 = vmul.f32 %v315, %v817
        %v842 = vmul.f32 %v316, %v818
        %v843 = vmul.f32 %v317, %v819
        %v844 = vmul.f32 %v318, %v820
        %v845 = vmul.f32 %v319, %v821
        %v846 = vmul.f32 %v320, %v822
        %v847 = vmul.f32 %v321, %v823
        %v848 = vmul.f32 %v322, %v824
        %v849 = vmul.f32 %v323, %v825
        %v850 = vmul.f32 %v324, %v826
        %v851 = vmul.f32 %v325, %v827
        %v852 = vmul.f32 %v326, %v828
        %v853 = vmul.f32 %v327, %v829
        %v854 = vmul.f32 %v328, %v830
        %v855 = vmul.f32 %v329, %v831
        %v856 = vadd.f32 %v832, %v833
        %v857 = vadd.f32 %v856, %v834
        %v858 = vadd.f32 %v857, %v835
        %v859 = vadd.f32 %v858, %v836
        %v860 = vadd.f32 %v859, %v837
        %v861 = vadd.f32 %v860, %v838
        %v862 = vadd.f32 %v861, %v839
        %v863 = vadd.f32 %v862, %v840
        %v864 = vadd.f32 %v863, %v841
        %v865 = vadd.f32 %v864, %v842
        %v866 = vadd.f32 %v865, %v843
        %v867 = vadd.f32 %v866, %v844
        %v868 = vadd.f32 %v867, %v845
        %v869 = vadd.f32 %v868, %v846
        %v870 = vadd.f32 %v869, %v847
        %v871 = vadd.f32 %v870, %v848
        %v872 = vadd.f32 %v871, %v849
        %v873 = vadd.f32 %v872, %v850
        %v874 = vadd.f32 %v873, %v851
        %v875 = vadd.f32 %v874, %v852
        %v876 = vadd.f32 %v875, %v853
        %v877 = vadd.f32 %v876, %v854
        %v878 = vadd.f32 %v877, %v855
        %v879 = vrot.slane %v878, 4
        %v880 = vadd.f32 %v878, %v879
        %v881 = vrot.slane %v880, 2
        %v882 = vadd.f32 %v880, %v881
        %v883 = vrot.slane %v882, 1
        %v884 = vadd.f32 %v882, %v883
        %885 = vadd.xlane.f32.xlu0 %v884
        %v886 = vpop.xlane.xlu0 %885
        %v887 = vmul.f32 %v386, %v808
        %v888 = vmul.f32 %v387, %v809
        %v889 = vmul.f32 %v388, %v810
        %v890 = vmul.f32 %v389, %v811
        %v891 = vmul.f32 %v390, %v812
        %v892 = vmul.f32 %v391, %v813
        %v893 = vmul.f32 %v392, %v814
        %v894 = vmul.f32 %v393, %v815
        %v895 = vmul.f32 %v394, %v816
        %v896 = vmul.f32 %v395, %v817
        %v897 = vmul.f32 %v396, %v818
        %v898 = vmul.f32 %v397, %v819
        %v899 = vmul.f32 %v398, %v820
        %v900 = vmul.f32 %v399, %v821
        %v901 = vmul.f32 %v400, %v822
        %v902 = vmul.f32 %v401, %v823
        %v903 = vmul.f32 %v402, %v824
        %v904 = vmul.f32 %v403, %v825
        %v905 = vmul.f32 %v404, %v826
        %v906 = vmul.f32 %v405, %v827
        %v907 = vmul.f32 %v406, %v828
        %v908 = vmul.f32 %v407, %v829
        %v909 = vmul.f32 %v408, %v830
        %v910 = vmul.f32 %v409, %v831
        %v911 = vadd.f32 %v887, %v888
        %v912 = vadd.f32 %v911, %v889
        %v913 = vadd.f32 %v912, %v890
        %v914 = vadd.f32 %v913, %v891
        %v915 = vadd.f32 %v914, %v892
        %v916 = vadd.f32 %v915, %v893
        %v917 = vadd.f32 %v916, %v894
        %v918 = vadd.f32 %v917, %v895
        %v919 = vadd.f32 %v918, %v896
        %v920 = vadd.f32 %v919, %v897
        %v921 = vadd.f32 %v920, %v898
        %v922 = vadd.f32 %v921, %v899
        %v923 = vadd.f32 %v922, %v900
        %v924 = vadd.f32 %v923, %v901
        %v925 = vadd.f32 %v924, %v902
        %v926 = vadd.f32 %v925, %v903
        %v927 = vadd.f32 %v926, %v904
        %v928 = vadd.f32 %v927, %v905
        %v929 = vadd.f32 %v928, %v906
        %v930 = vadd.f32 %v929, %v907
        %v931 = vadd.f32 %v930, %v908
        %v932 = vadd.f32 %v931, %v909
        %v933 = vadd.f32 %v932, %v910
        %v934 = vrot.slane %v933, 4
        %v935 = vadd.f32 %v933, %v934
        %v936 = vrot.slane %v935, 2
        %v937 = vadd.f32 %v935, %v936
        %v938 = vrot.slane %v937, 1
        %v939 = vadd.f32 %v937, %v938
        %940 = vadd.xlane.f32.xlu0 %v939
        %v941 = vpop.xlane.xlu0 %940
        %s942 = scalar_lea.vmem %s229, 384 [#allocation5]
        %v943 = vld [vmem:[%s942] sm:$0xf]
        %v944 = vld [vmem:[%s942 + $0x4] sm:$0xf]
        %v945 = vld [vmem:[%s942 + $0x8] sm:$0xf]
        %v946 = vld [vmem:[%s942 + $0xc] sm:$0xf]
        %v947 = vld [vmem:[%s942 + $0x10] sm:$0xf]
        %v948 = vld [vmem:[%s942 + $0x14] sm:$0xf]
        %v949 = vld [vmem:[%s942 + $0x18] sm:$0xf]
        %v950 = vld [vmem:[%s942 + $0x1c] sm:$0xf]
        %v951 = vld [vmem:[%s942 + $0x20] sm:$0xf]
        %v952 = vld [vmem:[%s942 + $0x24] sm:$0xf]
        %v953 = vld [vmem:[%s942 + $0x28] sm:$0xf]
        %v954 = vld [vmem:[%s942 + $0x2c] sm:$0xf]
        %v955 = vld [vmem:[%s942 + $0x30] sm:$0xf]
        %v956 = vld [vmem:[%s942 + $0x34] sm:$0xf]
        %v957 = vld [vmem:[%s942 + $0x38] sm:$0xf]
        %v958 = vld [vmem:[%s942 + $0x3c] sm:$0xf]
        %v959 = vld [vmem:[%s942 + $0x40] sm:$0xf]
        %v960 = vld [vmem:[%s942 + $0x44] sm:$0xf]
        %v961 = vld [vmem:[%s942 + $0x48] sm:$0xf]
        %v962 = vld [vmem:[%s942 + $0x4c] sm:$0xf]
        %v963 = vld [vmem:[%s942 + $0x50] sm:$0xf]
        %v964 = vld [vmem:[%s942 + $0x54] sm:$0xf]
        %v965 = vld [vmem:[%s942 + $0x58] sm:$0xf]
        %v966 = vld [vmem:[%s942 + $0x5c] sm:$0xf]
        %v967 = vunpack.c.l.bf16 %v943
        %v968 = vunpack.c.l.bf16 %v944
        %v969 = vunpack.c.l.bf16 %v945
        %v970 = vunpack.c.l.bf16 %v946
        %v971 = vunpack.c.l.bf16 %v947
        %v972 = vunpack.c.l.bf16 %v948
        %v973 = vunpack.c.l.bf16 %v949
        %v974 = vunpack.c.l.bf16 %v950
        %v975 = vunpack.c.l.bf16 %v951
        %v976 = vunpack.c.l.bf16 %v952
        %v977 = vunpack.c.l.bf16 %v953
        %v978 = vunpack.c.l.bf16 %v954
        %v979 = vunpack.c.l.bf16 %v955
        %v980 = vunpack.c.l.bf16 %v956
        %v981 = vunpack.c.l.bf16 %v957
        %v982 = vunpack.c.l.bf16 %v958
        %v983 = vunpack.c.l.bf16 %v959
        %v984 = vunpack.c.l.bf16 %v960
        %v985 = vunpack.c.l.bf16 %v961
        %v986 = vunpack.c.l.bf16 %v962
        %v987 = vunpack.c.l.bf16 %v963
        %v988 = vunpack.c.l.bf16 %v964
        %v989 = vunpack.c.l.bf16 %v965
        %v990 = vunpack.c.l.bf16 %v966
        %v991 = vmul.f32 %v306, %v967
        %v992 = vmul.f32 %v307, %v968
        %v993 = vmul.f32 %v308, %v969
        %v994 = vmul.f32 %v309, %v970
        %v995 = vmul.f32 %v310, %v971
        %v996 = vmul.f32 %v311, %v972
        %v997 = vmul.f32 %v312, %v973
        %v998 = vmul.f32 %v313, %v974
        %v999 = vmul.f32 %v314, %v975
        %v1000 = vmul.f32 %v315, %v976
        %v1001 = vmul.f32 %v316, %v977
        %v1002 = vmul.f32 %v317, %v978
        %v1003 = vmul.f32 %v318, %v979
        %v1004 = vmul.f32 %v319, %v980
        %v1005 = vmul.f32 %v320, %v981
        %v1006 = vmul.f32 %v321, %v982
        %v1007 = vmul.f32 %v322, %v983
        %v1008 = vmul.f32 %v323, %v984
        %v1009 = vmul.f32 %v324, %v985
        %v1010 = vmul.f32 %v325, %v986
        %v1011 = vmul.f32 %v326, %v987
        %v1012 = vmul.f32 %v327, %v988
        %v1013 = vmul.f32 %v328, %v989
        %v1014 = vmul.f32 %v329, %v990
        %v1015 = vadd.f32 %v991, %v992
        %v1016 = vadd.f32 %v1015, %v993
        %v1017 = vadd.f32 %v1016, %v994
        %v1018 = vadd.f32 %v1017, %v995
        %v1019 = vadd.f32 %v1018, %v996
        %v1020 = vadd.f32 %v1019, %v997
        %v1021 = vadd.f32 %v1020, %v998
        %v1022 = vadd.f32 %v1021, %v999
        %v1023 = vadd.f32 %v1022, %v1000
        %v1024 = vadd.f32 %v1023, %v1001
        %v1025 = vadd.f32 %v1024, %v1002
        %v1026 = vadd.f32 %v1025, %v1003
        %v1027 = vadd.f32 %v1026, %v1004
        %v1028 = vadd.f32 %v1027, %v1005
        %v1029 = vadd.f32 %v1028, %v1006
        %v1030 = vadd.f32 %v1029, %v1007
        %v1031 = vadd.f32 %v1030, %v1008
        %v1032 = vadd.f32 %v1031, %v1009
        %v1033 = vadd.f32 %v1032, %v1010
        %v1034 = vadd.f32 %v1033, %v1011
        %v1035 = vadd.f32 %v1034, %v1012
        %v1036 = vadd.f32 %v1035, %v1013
        %v1037 = vadd.f32 %v1036, %v1014
        %v1038 = vrot.slane %v1037, 4
        %v1039 = vadd.f32 %v1037, %v1038
        %v1040 = vrot.slane %v1039, 2
        %v1041 = vadd.f32 %v1039, %v1040
        %v1042 = vrot.slane %v1041, 1
        %v1043 = vadd.f32 %v1041, %v1042
        %1044 = vadd.xlane.f32.xlu0 %v1043
        %v1045 = vpop.xlane.xlu0 %1044
        %v1046 = vmul.f32 %v386, %v967
        %v1047 = vmul.f32 %v387, %v968
        %v1048 = vmul.f32 %v388, %v969
        %v1049 = vmul.f32 %v389, %v970
        %v1050 = vmul.f32 %v390, %v971
        %v1051 = vmul.f32 %v391, %v972
        %v1052 = vmul.f32 %v392, %v973
        %v1053 = vmul.f32 %v393, %v974
        %v1054 = vmul.f32 %v394, %v975
        %v1055 = vmul.f32 %v395, %v976
        %v1056 = vmul.f32 %v396, %v977
        %v1057 = vmul.f32 %v397, %v978
        %v1058 = vmul.f32 %v398, %v979
        %v1059 = vmul.f32 %v399, %v980
        %v1060 = vmul.f32 %v400, %v981
        %v1061 = vmul.f32 %v401, %v982
        %v1062 = vmul.f32 %v402, %v983
        %v1063 = vmul.f32 %v403, %v984
        %v1064 = vmul.f32 %v404, %v985
        %v1065 = vmul.f32 %v405, %v986
        %v1066 = vmul.f32 %v406, %v987
        %v1067 = vmul.f32 %v407, %v988
        %v1068 = vmul.f32 %v408, %v989
        %v1069 = vmul.f32 %v409, %v990
        %v1070 = vadd.f32 %v1046, %v1047
        %v1071 = vadd.f32 %v1070, %v1048
        %v1072 = vadd.f32 %v1071, %v1049
        %v1073 = vadd.f32 %v1072, %v1050
        %v1074 = vadd.f32 %v1073, %v1051
        %v1075 = vadd.f32 %v1074, %v1052
        %v1076 = vadd.f32 %v1075, %v1053
        %v1077 = vadd.f32 %v1076, %v1054
        %v1078 = vadd.f32 %v1077, %v1055
        %v1079 = vadd.f32 %v1078, %v1056
        %v1080 = vadd.f32 %v1079, %v1057
        %v1081 = vadd.f32 %v1080, %v1058
        %v1082 = vadd.f32 %v1081, %v1059
        %v1083 = vadd.f32 %v1082, %v1060
        %v1084 = vadd.f32 %v1083, %v1061
        %v1085 = vadd.f32 %v1084, %v1062
        %v1086 = vadd.f32 %v1085, %v1063
        %v1087 = vadd.f32 %v1086, %v1064
        %v1088 = vadd.f32 %v1087, %v1065
        %v1089 = vadd.f32 %v1088, %v1066
        %v1090 = vadd.f32 %v1089, %v1067
        %v1091 = vadd.f32 %v1090, %v1068
        %v1092 = vadd.f32 %v1091, %v1069
        %v1093 = vrot.slane %v1092, 4
        %v1094 = vadd.f32 %v1092, %v1093
        %v1095 = vrot.slane %v1094, 2
        %v1096 = vadd.f32 %v1094, %v1095
        %v1097 = vrot.slane %v1096, 1
        %v1098 = vadd.f32 %v1096, %v1097
        %1099 = vadd.xlane.f32.xlu0 %v1098
        %v1100 = vpop.xlane.xlu0 %1099
        %s1101 = scalar_lea.vmem %s229, 480 [#allocation5]
        %v1102 = vld [vmem:[%s1101] sm:$0xf]
        %v1103 = vld [vmem:[%s1101 + $0x4] sm:$0xf]
        %v1104 = vld [vmem:[%s1101 + $0x8] sm:$0xf]
        %v1105 = vld [vmem:[%s1101 + $0xc] sm:$0xf]
        %v1106 = vld [vmem:[%s1101 + $0x10] sm:$0xf]
        %v1107 = vld [vmem:[%s1101 + $0x14] sm:$0xf]
        %v1108 = vld [vmem:[%s1101 + $0x18] sm:$0xf]
        %v1109 = vld [vmem:[%s1101 + $0x1c] sm:$0xf]
        %v1110 = vld [vmem:[%s1101 + $0x20] sm:$0xf]
        %v1111 = vld [vmem:[%s1101 + $0x24] sm:$0xf]
        %v1112 = vld [vmem:[%s1101 + $0x28] sm:$0xf]
        %v1113 = vld [vmem:[%s1101 + $0x2c] sm:$0xf]
        %v1114 = vld [vmem:[%s1101 + $0x30] sm:$0xf]
        %v1115 = vld [vmem:[%s1101 + $0x34] sm:$0xf]
        %v1116 = vld [vmem:[%s1101 + $0x38] sm:$0xf]
        %v1117 = vld [vmem:[%s1101 + $0x3c] sm:$0xf]
        %v1118 = vld [vmem:[%s1101 + $0x40] sm:$0xf]
        %v1119 = vld [vmem:[%s1101 + $0x44] sm:$0xf]
        %v1120 = vld [vmem:[%s1101 + $0x48] sm:$0xf]
        %v1121 = vld [vmem:[%s1101 + $0x4c] sm:$0xf]
        %v1122 = vld [vmem:[%s1101 + $0x50] sm:$0xf]
        %v1123 = vld [vmem:[%s1101 + $0x54] sm:$0xf]
        %v1124 = vld [vmem:[%s1101 + $0x58] sm:$0xf]
        %v1125 = vld [vmem:[%s1101 + $0x5c] sm:$0xf]
        %v1126 = vunpack.c.l.bf16 %v1102
        %v1127 = vunpack.c.l.bf16 %v1103
        %v1128 = vunpack.c.l.bf16 %v1104
        %v1129 = vunpack.c.l.bf16 %v1105
        %v1130 = vunpack.c.l.bf16 %v1106
        %v1131 = vunpack.c.l.bf16 %v1107
        %v1132 = vunpack.c.l.bf16 %v1108
        %v1133 = vunpack.c.l.bf16 %v1109
        %v1134 = vunpack.c.l.bf16 %v1110
        %v1135 = vunpack.c.l.bf16 %v1111
        %v1136 = vunpack.c.l.bf16 %v1112
        %v1137 = vunpack.c.l.bf16 %v1113
        %v1138 = vunpack.c.l.bf16 %v1114
        %v1139 = vunpack.c.l.bf16 %v1115
        %v1140 = vunpack.c.l.bf16 %v1116
        %v1141 = vunpack.c.l.bf16 %v1117
        %v1142 = vunpack.c.l.bf16 %v1118
        %v1143 = vunpack.c.l.bf16 %v1119
        %v1144 = vunpack.c.l.bf16 %v1120
        %v1145 = vunpack.c.l.bf16 %v1121
        %v1146 = vunpack.c.l.bf16 %v1122
        %v1147 = vunpack.c.l.bf16 %v1123
        %v1148 = vunpack.c.l.bf16 %v1124
        %v1149 = vunpack.c.l.bf16 %v1125
        %v1150 = vmul.f32 %v306, %v1126
        %v1151 = vmul.f32 %v307, %v1127
        %v1152 = vmul.f32 %v308, %v1128
        %v1153 = vmul.f32 %v309, %v1129
        %v1154 = vmul.f32 %v310, %v1130
        %v1155 = vmul.f32 %v311, %v1131
        %v1156 = vmul.f32 %v312, %v1132
        %v1157 = vmul.f32 %v313, %v1133
        %v1158 = vmul.f32 %v314, %v1134
        %v1159 = vmul.f32 %v315, %v1135
        %v1160 = vmul.f32 %v316, %v1136
        %v1161 = vmul.f32 %v317, %v1137
        %v1162 = vmul.f32 %v318, %v1138
        %v1163 = vmul.f32 %v319, %v1139
        %v1164 = vmul.f32 %v320, %v1140
        %v1165 = vmul.f32 %v321, %v1141
        %v1166 = vmul.f32 %v322, %v1142
        %v1167 = vmul.f32 %v323, %v1143
        %v1168 = vmul.f32 %v324, %v1144
        %v1169 = vmul.f32 %v325, %v1145
        %v1170 = vmul.f32 %v326, %v1146
        %v1171 = vmul.f32 %v327, %v1147
        %v1172 = vmul.f32 %v328, %v1148
        %v1173 = vmul.f32 %v329, %v1149
        %v1174 = vadd.f32 %v1150, %v1151
        %v1175 = vadd.f32 %v1174, %v1152
        %v1176 = vadd.f32 %v1175, %v1153
        %v1177 = vadd.f32 %v1176, %v1154
        %v1178 = vadd.f32 %v1177, %v1155
        %v1179 = vadd.f32 %v1178, %v1156
        %v1180 = vadd.f32 %v1179, %v1157
        %v1181 = vadd.f32 %v1180, %v1158
        %v1182 = vadd.f32 %v1181, %v1159
        %v1183 = vadd.f32 %v1182, %v1160
        %v1184 = vadd.f32 %v1183, %v1161
        %v1185 = vadd.f32 %v1184, %v1162
        %v1186 = vadd.f32 %v1185, %v1163
        %v1187 = vadd.f32 %v1186, %v1164
        %v1188 = vadd.f32 %v1187, %v1165
        %v1189 = vadd.f32 %v1188, %v1166
        %v1190 = vadd.f32 %v1189, %v1167
        %v1191 = vadd.f32 %v1190, %v1168
        %v1192 = vadd.f32 %v1191, %v1169
        %v1193 = vadd.f32 %v1192, %v1170
        %v1194 = vadd.f32 %v1193, %v1171
        %v1195 = vadd.f32 %v1194, %v1172
        %v1196 = vadd.f32 %v1195, %v1173
        %v1197 = vrot.slane %v1196, 4
        %v1198 = vadd.f32 %v1196, %v1197
        %v1199 = vrot.slane %v1198, 2
        %v1200 = vadd.f32 %v1198, %v1199
        %v1201 = vrot.slane %v1200, 1
        %v1202 = vadd.f32 %v1200, %v1201
        %1203 = vadd.xlane.f32.xlu0 %v1202
        %v1204 = vpop.xlane.xlu0 %1203
        %v1205 = vmul.f32 %v386, %v1126
        %v1206 = vmul.f32 %v387, %v1127
        %v1207 = vmul.f32 %v388, %v1128
        %v1208 = vmul.f32 %v389, %v1129
        %v1209 = vmul.f32 %v390, %v1130
        %v1210 = vmul.f32 %v391, %v1131
        %v1211 = vmul.f32 %v392, %v1132
        %v1212 = vmul.f32 %v393, %v1133
        %v1213 = vmul.f32 %v394, %v1134
        %v1214 = vmul.f32 %v395, %v1135
        %v1215 = vmul.f32 %v396, %v1136
        %v1216 = vmul.f32 %v397, %v1137
        %v1217 = vmul.f32 %v398, %v1138
        %v1218 = vmul.f32 %v399, %v1139
        %v1219 = vmul.f32 %v400, %v1140
        %v1220 = vmul.f32 %v401, %v1141
        %v1221 = vmul.f32 %v402, %v1142
        %v1222 = vmul.f32 %v403, %v1143
        %v1223 = vmul.f32 %v404, %v1144
        %v1224 = vmul.f32 %v405, %v1145
        %v1225 = vmul.f32 %v406, %v1146
        %v1226 = vmul.f32 %v407, %v1147
        %v1227 = vmul.f32 %v408, %v1148
        %v1228 = vmul.f32 %v409, %v1149
        %v1229 = vadd.f32 %v1205, %v1206
        %v1230 = vadd.f32 %v1229, %v1207
        %v1231 = vadd.f32 %v1230, %v1208
        %v1232 = vadd.f32 %v1231, %v1209
        %v1233 = vadd.f32 %v1232, %v1210
        %v1234 = vadd.f32 %v1233, %v1211
        %v1235 = vadd.f32 %v1234, %v1212
        %v1236 = vadd.f32 %v1235, %v1213
        %v1237 = vadd.f32 %v1236, %v1214
        %v1238 = vadd.f32 %v1237, %v1215
        %v1239 = vadd.f32 %v1238, %v1216
        %v1240 = vadd.f32 %v1239, %v1217
        %v1241 = vadd.f32 %v1240, %v1218
        %v1242 = vadd.f32 %v1241, %v1219
        %v1243 = vadd.f32 %v1242, %v1220
        %v1244 = vadd.f32 %v1243, %v1221
        %v1245 = vadd.f32 %v1244, %v1222
        %v1246 = vadd.f32 %v1245, %v1223
        %v1247 = vadd.f32 %v1246, %v1224
        %v1248 = vadd.f32 %v1247, %v1225
        %v1249 = vadd.f32 %v1248, %v1226
        %v1250 = vadd.f32 %v1249, %v1227
        %v1251 = vadd.f32 %v1250, %v1228
        %v1252 = vrot.slane %v1251, 4
        %v1253 = vadd.f32 %v1251, %v1252
        %v1254 = vrot.slane %v1253, 2
        %v1255 = vadd.f32 %v1253, %v1254
        %v1256 = vrot.slane %v1255, 1
        %v1257 = vadd.f32 %v1255, %v1256
        %1258 = vadd.xlane.f32.xlu0 %v1257
        %v1259 = vpop.xlane.xlu0 %1258
        %s1260 = scalar_lea.vmem %s229, 576 [#allocation5]
        %v1261 = vld [vmem:[%s1260] sm:$0xf]
        %v1262 = vld [vmem:[%s1260 + $0x4] sm:$0xf]
        %v1263 = vld [vmem:[%s1260 + $0x8] sm:$0xf]
        %v1264 = vld [vmem:[%s1260 + $0xc] sm:$0xf]
        %v1265 = vld [vmem:[%s1260 + $0x10] sm:$0xf]
        %v1266 = vld [vmem:[%s1260 + $0x14] sm:$0xf]
        %v1267 = vld [vmem:[%s1260 + $0x18] sm:$0xf]
        %v1268 = vld [vmem:[%s1260 + $0x1c] sm:$0xf]
        %v1269 = vld [vmem:[%s1260 + $0x20] sm:$0xf]
        %v1270 = vld [vmem:[%s1260 + $0x24] sm:$0xf]
        %v1271 = vld [vmem:[%s1260 + $0x28] sm:$0xf]
        %v1272 = vld [vmem:[%s1260 + $0x2c] sm:$0xf]
        %v1273 = vld [vmem:[%s1260 + $0x30] sm:$0xf]
        %v1274 = vld [vmem:[%s1260 + $0x34] sm:$0xf]
        %v1275 = vld [vmem:[%s1260 + $0x38] sm:$0xf]
        %v1276 = vld [vmem:[%s1260 + $0x3c] sm:$0xf]
        %v1277 = vld [vmem:[%s1260 + $0x40] sm:$0xf]
        %v1278 = vld [vmem:[%s1260 + $0x44] sm:$0xf]
        %v1279 = vld [vmem:[%s1260 + $0x48] sm:$0xf]
        %v1280 = vld [vmem:[%s1260 + $0x4c] sm:$0xf]
        %v1281 = vld [vmem:[%s1260 + $0x50] sm:$0xf]
        %v1282 = vld [vmem:[%s1260 + $0x54] sm:$0xf]
        %v1283 = vld [vmem:[%s1260 + $0x58] sm:$0xf]
        %v1284 = vld [vmem:[%s1260 + $0x5c] sm:$0xf]
        %v1285 = vunpack.c.l.bf16 %v1261
        %v1286 = vunpack.c.l.bf16 %v1262
        %v1287 = vunpack.c.l.bf16 %v1263
        %v1288 = vunpack.c.l.bf16 %v1264
        %v1289 = vunpack.c.l.bf16 %v1265
        %v1290 = vunpack.c.l.bf16 %v1266
        %v1291 = vunpack.c.l.bf16 %v1267
        %v1292 = vunpack.c.l.bf16 %v1268
        %v1293 = vunpack.c.l.bf16 %v1269
        %v1294 = vunpack.c.l.bf16 %v1270
        %v1295 = vunpack.c.l.bf16 %v1271
        %v1296 = vunpack.c.l.bf16 %v1272
        %v1297 = vunpack.c.l.bf16 %v1273
        %v1298 = vunpack.c.l.bf16 %v1274
        %v1299 = vunpack.c.l.bf16 %v1275
        %v1300 = vunpack.c.l.bf16 %v1276
        %v1301 = vunpack.c.l.bf16 %v1277
        %v1302 = vunpack.c.l.bf16 %v1278
        %v1303 = vunpack.c.l.bf16 %v1279
        %v1304 = vunpack.c.l.bf16 %v1280
        %v1305 = vunpack.c.l.bf16 %v1281
        %v1306 = vunpack.c.l.bf16 %v1282
        %v1307 = vunpack.c.l.bf16 %v1283
        %v1308 = vunpack.c.l.bf16 %v1284
        %v1309 = vmul.f32 %v306, %v1285
        %v1310 = vmul.f32 %v307, %v1286
        %v1311 = vmul.f32 %v308, %v1287
        %v1312 = vmul.f32 %v309, %v1288
        %v1313 = vmul.f32 %v310, %v1289
        %v1314 = vmul.f32 %v311, %v1290
        %v1315 = vmul.f32 %v312, %v1291
        %v1316 = vmul.f32 %v313, %v1292
        %v1317 = vmul.f32 %v314, %v1293
        %v1318 = vmul.f32 %v315, %v1294
        %v1319 = vmul.f32 %v316, %v1295
        %v1320 = vmul.f32 %v317, %v1296
        %v1321 = vmul.f32 %v318, %v1297
        %v1322 = vmul.f32 %v319, %v1298
        %v1323 = vmul.f32 %v320, %v1299
        %v1324 = vmul.f32 %v321, %v1300
        %v1325 = vmul.f32 %v322, %v1301
        %v1326 = vmul.f32 %v323, %v1302
        %v1327 = vmul.f32 %v324, %v1303
        %v1328 = vmul.f32 %v325, %v1304
        %v1329 = vmul.f32 %v326, %v1305
        %v1330 = vmul.f32 %v327, %v1306
        %v1331 = vmul.f32 %v328, %v1307
        %v1332 = vmul.f32 %v329, %v1308
        %v1333 = vadd.f32 %v1309, %v1310
        %v1334 = vadd.f32 %v1333, %v1311
        %v1335 = vadd.f32 %v1334, %v1312
        %v1336 = vadd.f32 %v1335, %v1313
        %v1337 = vadd.f32 %v1336, %v1314
        %v1338 = vadd.f32 %v1337, %v1315
        %v1339 = vadd.f32 %v1338, %v1316
        %v1340 = vadd.f32 %v1339, %v1317
        %v1341 = vadd.f32 %v1340, %v1318
        %v1342 = vadd.f32 %v1341, %v1319
        %v1343 = vadd.f32 %v1342, %v1320
        %v1344 = vadd.f32 %v1343, %v1321
        %v1345 = vadd.f32 %v1344, %v1322
        %v1346 = vadd.f32 %v1345, %v1323
        %v1347 = vadd.f32 %v1346, %v1324
        %v1348 = vadd.f32 %v1347, %v1325
        %v1349 = vadd.f32 %v1348, %v1326
        %v1350 = vadd.f32 %v1349, %v1327
        %v1351 = vadd.f32 %v1350, %v1328
        %v1352 = vadd.f32 %v1351, %v1329
        %v1353 = vadd.f32 %v1352, %v1330
        %v1354 = vadd.f32 %v1353, %v1331
        %v1355 = vadd.f32 %v1354, %v1332
        %v1356 = vrot.slane %v1355, 4
        %v1357 = vadd.f32 %v1355, %v1356
        %v1358 = vrot.slane %v1357, 2
        %v1359 = vadd.f32 %v1357, %v1358
        %v1360 = vrot.slane %v1359, 1
        %v1361 = vadd.f32 %v1359, %v1360
        %1362 = vadd.xlane.f32.xlu0 %v1361
        %v1363 = vpop.xlane.xlu0 %1362
        %v1364 = vmul.f32 %v386, %v1285
        %v1365 = vmul.f32 %v387, %v1286
        %v1366 = vmul.f32 %v388, %v1287
        %v1367 = vmul.f32 %v389, %v1288
        %v1368 = vmul.f32 %v390, %v1289
        %v1369 = vmul.f32 %v391, %v1290
        %v1370 = vmul.f32 %v392, %v1291
        %v1371 = vmul.f32 %v393, %v1292
        %v1372 = vmul.f32 %v394, %v1293
        %v1373 = vmul.f32 %v395, %v1294
        %v1374 = vmul.f32 %v396, %v1295
        %v1375 = vmul.f32 %v397, %v1296
        %v1376 = vmul.f32 %v398, %v1297
        %v1377 = vmul.f32 %v399, %v1298
        %v1378 = vmul.f32 %v400, %v1299
        %v1379 = vmul.f32 %v401, %v1300
        %v1380 = vmul.f32 %v402, %v1301
        %v1381 = vmul.f32 %v403, %v1302
        %v1382 = vmul.f32 %v404, %v1303
        %v1383 = vmul.f32 %v405, %v1304
        %v1384 = vmul.f32 %v406, %v1305
        %v1385 = vmul.f32 %v407, %v1306
        %v1386 = vmul.f32 %v408, %v1307
        %v1387 = vmul.f32 %v409, %v1308
        %v1388 = vadd.f32 %v1364, %v1365
        %v1389 = vadd.f32 %v1388, %v1366
        %v1390 = vadd.f32 %v1389, %v1367
        %v1391 = vadd.f32 %v1390, %v1368
        %v1392 = vadd.f32 %v1391, %v1369
        %v1393 = vadd.f32 %v1392, %v1370
        %v1394 = vadd.f32 %v1393, %v1371
        %v1395 = vadd.f32 %v1394, %v1372
        %v1396 = vadd.f32 %v1395, %v1373
        %v1397 = vadd.f32 %v1396, %v1374
        %v1398 = vadd.f32 %v1397, %v1375
        %v1399 = vadd.f32 %v1398, %v1376
        %v1400 = vadd.f32 %v1399, %v1377
        %v1401 = vadd.f32 %v1400, %v1378
        %v1402 = vadd.f32 %v1401, %v1379
        %v1403 = vadd.f32 %v1402, %v1380
        %v1404 = vadd.f32 %v1403, %v1381
        %v1405 = vadd.f32 %v1404, %v1382
        %v1406 = vadd.f32 %v1405, %v1383
        %v1407 = vadd.f32 %v1406, %v1384
        %v1408 = vadd.f32 %v1407, %v1385
        %v1409 = vadd.f32 %v1408, %v1386
        %v1410 = vadd.f32 %v1409, %v1387
        %v1411 = vrot.slane %v1410, 4
        %v1412 = vadd.f32 %v1410, %v1411
        %v1413 = vrot.slane %v1412, 2
        %v1414 = vadd.f32 %v1412, %v1413
        %v1415 = vrot.slane %v1414, 1
        %v1416 = vadd.f32 %v1414, %v1415
        %1417 = vadd.xlane.f32.xlu0 %v1416
        %v1418 = vpop.xlane.xlu0 %1417
        %s1419 = scalar_lea.vmem %s229, 672 [#allocation5]
        %v1420 = vld [vmem:[%s1419] sm:$0xf]
        %v1421 = vld [vmem:[%s1419 + $0x4] sm:$0xf]
        %v1422 = vld [vmem:[%s1419 + $0x8] sm:$0xf]
        %v1423 = vld [vmem:[%s1419 + $0xc] sm:$0xf]
        %v1424 = vld [vmem:[%s1419 + $0x10] sm:$0xf]
        %v1425 = vld [vmem:[%s1419 + $0x14] sm:$0xf]
        %v1426 = vld [vmem:[%s1419 + $0x18] sm:$0xf]
        %v1427 = vld [vmem:[%s1419 + $0x1c] sm:$0xf]
        %v1428 = vld [vmem:[%s1419 + $0x20] sm:$0xf]
        %v1429 = vld [vmem:[%s1419 + $0x24] sm:$0xf]
        %v1430 = vld [vmem:[%s1419 + $0x28] sm:$0xf]
        %v1431 = vld [vmem:[%s1419 + $0x2c] sm:$0xf]
        %v1432 = vld [vmem:[%s1419 + $0x30] sm:$0xf]
        %v1433 = vld [vmem:[%s1419 + $0x34] sm:$0xf]
        %v1434 = vld [vmem:[%s1419 + $0x38] sm:$0xf]
        %v1435 = vld [vmem:[%s1419 + $0x3c] sm:$0xf]
        %v1436 = vld [vmem:[%s1419 + $0x40] sm:$0xf]
        %v1437 = vld [vmem:[%s1419 + $0x44] sm:$0xf]
        %v1438 = vld [vmem:[%s1419 + $0x48] sm:$0xf]
        %v1439 = vld [vmem:[%s1419 + $0x4c] sm:$0xf]
        %v1440 = vld [vmem:[%s1419 + $0x50] sm:$0xf]
        %v1441 = vld [vmem:[%s1419 + $0x54] sm:$0xf]
        %v1442 = vld [vmem:[%s1419 + $0x58] sm:$0xf]
        %v1443 = vld [vmem:[%s1419 + $0x5c] sm:$0xf]
        %v1444 = vunpack.c.l.bf16 %v1420
        %v1445 = vunpack.c.l.bf16 %v1421
        %v1446 = vunpack.c.l.bf16 %v1422
        %v1447 = vunpack.c.l.bf16 %v1423
        %v1448 = vunpack.c.l.bf16 %v1424
        %v1449 = vunpack.c.l.bf16 %v1425
        %v1450 = vunpack.c.l.bf16 %v1426
        %v1451 = vunpack.c.l.bf16 %v1427
        %v1452 = vunpack.c.l.bf16 %v1428
        %v1453 = vunpack.c.l.bf16 %v1429
        %v1454 = vunpack.c.l.bf16 %v1430
        %v1455 = vunpack.c.l.bf16 %v1431
        %v1456 = vunpack.c.l.bf16 %v1432
        %v1457 = vunpack.c.l.bf16 %v1433
        %v1458 = vunpack.c.l.bf16 %v1434
        %v1459 = vunpack.c.l.bf16 %v1435
        %v1460 = vunpack.c.l.bf16 %v1436
        %v1461 = vunpack.c.l.bf16 %v1437
        %v1462 = vunpack.c.l.bf16 %v1438
        %v1463 = vunpack.c.l.bf16 %v1439
        %v1464 = vunpack.c.l.bf16 %v1440
        %v1465 = vunpack.c.l.bf16 %v1441
        %v1466 = vunpack.c.l.bf16 %v1442
        %v1467 = vunpack.c.l.bf16 %v1443
        %v1468 = vmul.f32 %v306, %v1444
        %v1469 = vmul.f32 %v307, %v1445
        %v1470 = vmul.f32 %v308, %v1446
        %v1471 = vmul.f32 %v309, %v1447
        %v1472 = vmul.f32 %v310, %v1448
        %v1473 = vmul.f32 %v311, %v1449
        %v1474 = vmul.f32 %v312, %v1450
        %v1475 = vmul.f32 %v313, %v1451
        %v1476 = vmul.f32 %v314, %v1452
        %v1477 = vmul.f32 %v315, %v1453
        %v1478 = vmul.f32 %v316, %v1454
        %v1479 = vmul.f32 %v317, %v1455
        %v1480 = vmul.f32 %v318, %v1456
        %v1481 = vmul.f32 %v319, %v1457
        %v1482 = vmul.f32 %v320, %v1458
        %v1483 = vmul.f32 %v321, %v1459
        %v1484 = vmul.f32 %v322, %v1460
        %v1485 = vmul.f32 %v323, %v1461
        %v1486 = vmul.f32 %v324, %v1462
        %v1487 = vmul.f32 %v325, %v1463
        %v1488 = vmul.f32 %v326, %v1464
        %v1489 = vmul.f32 %v327, %v1465
        %v1490 = vmul.f32 %v328, %v1466
        %v1491 = vmul.f32 %v329, %v1467
        %v1492 = vadd.f32 %v1468, %v1469
        %v1493 = vadd.f32 %v1492, %v1470
        %v1494 = vadd.f32 %v1493, %v1471
        %v1495 = vadd.f32 %v1494, %v1472
        %v1496 = vadd.f32 %v1495, %v1473
        %v1497 = vadd.f32 %v1496, %v1474
        %v1498 = vadd.f32 %v1497, %v1475
        %v1499 = vadd.f32 %v1498, %v1476
        %v1500 = vadd.f32 %v1499, %v1477
        %v1501 = vadd.f32 %v1500, %v1478
        %v1502 = vadd.f32 %v1501, %v1479
        %v1503 = vadd.f32 %v1502, %v1480
        %v1504 = vadd.f32 %v1503, %v1481
        %v1505 = vadd.f32 %v1504, %v1482
        %v1506 = vadd.f32 %v1505, %v1483
        %v1507 = vadd.f32 %v1506, %v1484
        %v1508 = vadd.f32 %v1507, %v1485
        %v1509 = vadd.f32 %v1508, %v1486
        %v1510 = vadd.f32 %v1509, %v1487
        %v1511 = vadd.f32 %v1510, %v1488
        %v1512 = vadd.f32 %v1511, %v1489
        %v1513 = vadd.f32 %v1512, %v1490
        %v1514 = vadd.f32 %v1513, %v1491
        %v1515 = vrot.slane %v1514, 4
        %v1516 = vadd.f32 %v1514, %v1515
        %v1517 = vrot.slane %v1516, 2
        %v1518 = vadd.f32 %v1516, %v1517
        %v1519 = vrot.slane %v1518, 1
        %v1520 = vadd.f32 %v1518, %v1519
        %1521 = vadd.xlane.f32.xlu0 %v1520
        %v1522 = vpop.xlane.xlu0 %1521
        %v1523 = vmul.f32 %v386, %v1444
        %v1524 = vmul.f32 %v387, %v1445
        %v1525 = vmul.f32 %v388, %v1446
        %v1526 = vmul.f32 %v389, %v1447
        %v1527 = vmul.f32 %v390, %v1448
        %v1528 = vmul.f32 %v391, %v1449
        %v1529 = vmul.f32 %v392, %v1450
        %v1530 = vmul.f32 %v393, %v1451
        %v1531 = vmul.f32 %v394, %v1452
        %v1532 = vmul.f32 %v395, %v1453
        %v1533 = vmul.f32 %v396, %v1454
        %v1534 = vmul.f32 %v397, %v1455
        %v1535 = vmul.f32 %v398, %v1456
        %v1536 = vmul.f32 %v399, %v1457
        %v1537 = vmul.f32 %v400, %v1458
        %v1538 = vmul.f32 %v401, %v1459
        %v1539 = vmul.f32 %v402, %v1460
        %v1540 = vmul.f32 %v403, %v1461
        %v1541 = vmul.f32 %v404, %v1462
        %v1542 = vmul.f32 %v405, %v1463
        %v1543 = vmul.f32 %v406, %v1464
        %v1544 = vmul.f32 %v407, %v1465
        %v1545 = vmul.f32 %v408, %v1466
        %v1546 = vmul.f32 %v409, %v1467
        %v1547 = vadd.f32 %v1523, %v1524
        %v1548 = vadd.f32 %v1547, %v1525
        %v1549 = vadd.f32 %v1548, %v1526
        %v1550 = vadd.f32 %v1549, %v1527
        %v1551 = vadd.f32 %v1550, %v1528
        %v1552 = vadd.f32 %v1551, %v1529
        %v1553 = vadd.f32 %v1552, %v1530
        %v1554 = vadd.f32 %v1553, %v1531
        %v1555 = vadd.f32 %v1554, %v1532
        %v1556 = vadd.f32 %v1555, %v1533
        %v1557 = vadd.f32 %v1556, %v1534
        %v1558 = vadd.f32 %v1557, %v1535
        %v1559 = vadd.f32 %v1558, %v1536
        %v1560 = vadd.f32 %v1559, %v1537
        %v1561 = vadd.f32 %v1560, %v1538
        %v1562 = vadd.f32 %v1561, %v1539
        %v1563 = vadd.f32 %v1562, %v1540
        %v1564 = vadd.f32 %v1563, %v1541
        %v1565 = vadd.f32 %v1564, %v1542
        %v1566 = vadd.f32 %v1565, %v1543
        %v1567 = vadd.f32 %v1566, %v1544
        %v1568 = vadd.f32 %v1567, %v1545
        %v1569 = vadd.f32 %v1568, %v1546
        %v1570 = vrot.slane %v1569, 4
        %v1571 = vadd.f32 %v1569, %v1570
        %v1572 = vrot.slane %v1571, 2
        %v1573 = vadd.f32 %v1571, %v1572
        %v1574 = vrot.slane %v1573, 1
        %v1575 = vadd.f32 %v1573, %v1574
        %1576 = vadd.xlane.f32.xlu0 %v1575
        %v1577 = vpop.xlane.xlu0 %1576
        %s1578 = scalar_lea.vmem %s229, 768 [#allocation5]
        %v1579 = vld [vmem:[%s1578] sm:$0xf]
        %v1580 = vld [vmem:[%s1578 + $0x4] sm:$0xf]
        %v1581 = vld [vmem:[%s1578 + $0x8] sm:$0xf]
        %v1582 = vld [vmem:[%s1578 + $0xc] sm:$0xf]
        %v1583 = vld [vmem:[%s1578 + $0x10] sm:$0xf]
        %v1584 = vld [vmem:[%s1578 + $0x14] sm:$0xf]
        %v1585 = vld [vmem:[%s1578 + $0x18] sm:$0xf]
        %v1586 = vld [vmem:[%s1578 + $0x1c] sm:$0xf]
        %v1587 = vld [vmem:[%s1578 + $0x20] sm:$0xf]
        %v1588 = vld [vmem:[%s1578 + $0x24] sm:$0xf]
        %v1589 = vld [vmem:[%s1578 + $0x28] sm:$0xf]
        %v1590 = vld [vmem:[%s1578 + $0x2c] sm:$0xf]
        %v1591 = vld [vmem:[%s1578 + $0x30] sm:$0xf]
        %v1592 = vld [vmem:[%s1578 + $0x34] sm:$0xf]
        %v1593 = vld [vmem:[%s1578 + $0x38] sm:$0xf]
        %v1594 = vld [vmem:[%s1578 + $0x3c] sm:$0xf]
        %v1595 = vld [vmem:[%s1578 + $0x40] sm:$0xf]
        %v1596 = vld [vmem:[%s1578 + $0x44] sm:$0xf]
        %v1597 = vld [vmem:[%s1578 + $0x48] sm:$0xf]
        %v1598 = vld [vmem:[%s1578 + $0x4c] sm:$0xf]
        %v1599 = vld [vmem:[%s1578 + $0x50] sm:$0xf]
        %v1600 = vld [vmem:[%s1578 + $0x54] sm:$0xf]
        %v1601 = vld [vmem:[%s1578 + $0x58] sm:$0xf]
        %v1602 = vld [vmem:[%s1578 + $0x5c] sm:$0xf]
        %v1603 = vunpack.c.l.bf16 %v1579
        %v1604 = vunpack.c.l.bf16 %v1580
        %v1605 = vunpack.c.l.bf16 %v1581
        %v1606 = vunpack.c.l.bf16 %v1582
        %v1607 = vunpack.c.l.bf16 %v1583
        %v1608 = vunpack.c.l.bf16 %v1584
        %v1609 = vunpack.c.l.bf16 %v1585
        %v1610 = vunpack.c.l.bf16 %v1586
        %v1611 = vunpack.c.l.bf16 %v1587
        %v1612 = vunpack.c.l.bf16 %v1588
        %v1613 = vunpack.c.l.bf16 %v1589
        %v1614 = vunpack.c.l.bf16 %v1590
        %v1615 = vunpack.c.l.bf16 %v1591
        %v1616 = vunpack.c.l.bf16 %v1592
        %v1617 = vunpack.c.l.bf16 %v1593
        %v1618 = vunpack.c.l.bf16 %v1594
        %v1619 = vunpack.c.l.bf16 %v1595
        %v1620 = vunpack.c.l.bf16 %v1596
        %v1621 = vunpack.c.l.bf16 %v1597
        %v1622 = vunpack.c.l.bf16 %v1598
        %v1623 = vunpack.c.l.bf16 %v1599
        %v1624 = vunpack.c.l.bf16 %v1600
        %v1625 = vunpack.c.l.bf16 %v1601
        %v1626 = vunpack.c.l.bf16 %v1602
        %v1627 = vmul.f32 %v306, %v1603
        %v1628 = vmul.f32 %v307, %v1604
        %v1629 = vmul.f32 %v308, %v1605
        %v1630 = vmul.f32 %v309, %v1606
        %v1631 = vmul.f32 %v310, %v1607
        %v1632 = vmul.f32 %v311, %v1608
        %v1633 = vmul.f32 %v312, %v1609
        %v1634 = vmul.f32 %v313, %v1610
        %v1635 = vmul.f32 %v314, %v1611
        %v1636 = vmul.f32 %v315, %v1612
        %v1637 = vmul.f32 %v316, %v1613
        %v1638 = vmul.f32 %v317, %v1614
        %v1639 = vmul.f32 %v318, %v1615
        %v1640 = vmul.f32 %v319, %v1616
        %v1641 = vmul.f32 %v320, %v1617
        %v1642 = vmul.f32 %v321, %v1618
        %v1643 = vmul.f32 %v322, %v1619
        %v1644 = vmul.f32 %v323, %v1620
        %v1645 = vmul.f32 %v324, %v1621
        %v1646 = vmul.f32 %v325, %v1622
        %v1647 = vmul.f32 %v326, %v1623
        %v1648 = vmul.f32 %v327, %v1624
        %v1649 = vmul.f32 %v328, %v1625
        %v1650 = vmul.f32 %v329, %v1626
        %v1651 = vadd.f32 %v1627, %v1628
        %v1652 = vadd.f32 %v1651, %v1629
        %v1653 = vadd.f32 %v1652, %v1630
        %v1654 = vadd.f32 %v1653, %v1631
        %v1655 = vadd.f32 %v1654, %v1632
        %v1656 = vadd.f32 %v1655, %v1633
        %v1657 = vadd.f32 %v1656, %v1634
        %v1658 = vadd.f32 %v1657, %v1635
        %v1659 = vadd.f32 %v1658, %v1636
        %v1660 = vadd.f32 %v1659, %v1637
        %v1661 = vadd.f32 %v1660, %v1638
        %v1662 = vadd.f32 %v1661, %v1639
        %v1663 = vadd.f32 %v1662, %v1640
        %v1664 = vadd.f32 %v1663, %v1641
        %v1665 = vadd.f32 %v1664, %v1642
        %v1666 = vadd.f32 %v1665, %v1643
        %v1667 = vadd.f32 %v1666, %v1644
        %v1668 = vadd.f32 %v1667, %v1645
        %v1669 = vadd.f32 %v1668, %v1646
        %v1670 = vadd.f32 %v1669, %v1647
        %v1671 = vadd.f32 %v1670, %v1648
        %v1672 = vadd.f32 %v1671, %v1649
        %v1673 = vadd.f32 %v1672, %v1650
        %v1674 = vrot.slane %v1673, 4
        %v1675 = vadd.f32 %v1673, %v1674
        %v1676 = vrot.slane %v1675, 2
        %v1677 = vadd.f32 %v1675, %v1676
        %v1678 = vrot.slane %v1677, 1
        %v1679 = vadd.f32 %v1677, %v1678
        %1680 = vadd.xlane.f32.xlu0 %v1679
        %v1681 = vpop.xlane.xlu0 %1680
        %v1682 = vmul.f32 %v386, %v1603
        %v1683 = vmul.f32 %v387, %v1604
        %v1684 = vmul.f32 %v388, %v1605
        %v1685 = vmul.f32 %v389, %v1606
        %v1686 = vmul.f32 %v390, %v1607
        %v1687 = vmul.f32 %v391, %v1608
        %v1688 = vmul.f32 %v392, %v1609
        %v1689 = vmul.f32 %v393, %v1610
        %v1690 = vmul.f32 %v394, %v1611
        %v1691 = vmul.f32 %v395, %v1612
        %v1692 = vmul.f32 %v396, %v1613
        %v1693 = vmul.f32 %v397, %v1614
        %v1694 = vmul.f32 %v398, %v1615
        %v1695 = vmul.f32 %v399, %v1616
        %v1696 = vmul.f32 %v400, %v1617
        %v1697 = vmul.f32 %v401, %v1618
        %v1698 = vmul.f32 %v402, %v1619
        %v1699 = vmul.f32 %v403, %v1620
        %v1700 = vmul.f32 %v404, %v1621
        %v1701 = vmul.f32 %v405, %v1622
        %v1702 = vmul.f32 %v406, %v1623
        %v1703 = vmul.f32 %v407, %v1624
        %v1704 = vmul.f32 %v408, %v1625
        %v1705 = vmul.f32 %v409, %v1626
        %v1706 = vadd.f32 %v1682, %v1683
        %v1707 = vadd.f32 %v1706, %v1684
        %v1708 = vadd.f32 %v1707, %v1685
        %v1709 = vadd.f32 %v1708, %v1686
        %v1710 = vadd.f32 %v1709, %v1687
        %v1711 = vadd.f32 %v1710, %v1688
        %v1712 = vadd.f32 %v1711, %v1689
        %v1713 = vadd.f32 %v1712, %v1690
        %v1714 = vadd.f32 %v1713, %v1691
        %v1715 = vadd.f32 %v1714, %v1692
        %v1716 = vadd.f32 %v1715, %v1693
        %v1717 = vadd.f32 %v1716, %v1694
        %v1718 = vadd.f32 %v1717, %v1695
        %v1719 = vadd.f32 %v1718, %v1696
        %v1720 = vadd.f32 %v1719, %v1697
        %v1721 = vadd.f32 %v1720, %v1698
        %v1722 = vadd.f32 %v1721, %v1699
        %v1723 = vadd.f32 %v1722, %v1700
        %v1724 = vadd.f32 %v1723, %v1701
        %v1725 = vadd.f32 %v1724, %v1702
        %v1726 = vadd.f32 %v1725, %v1703
        %v1727 = vadd.f32 %v1726, %v1704
        %v1728 = vadd.f32 %v1727, %v1705
        %v1729 = vrot.slane %v1728, 4
        %v1730 = vadd.f32 %v1728, %v1729
        %v1731 = vrot.slane %v1730, 2
        %v1732 = vadd.f32 %v1730, %v1731
        %v1733 = vrot.slane %v1732, 1
        %v1734 = vadd.f32 %v1732, %v1733
        %1735 = vadd.xlane.f32.xlu0 %v1734
        %v1736 = vpop.xlane.xlu0 %1735
        %s1737 = scalar_lea.vmem %s229, 864 [#allocation5]
        %v1738 = vld [vmem:[%s1737] sm:$0xf]
        %v1739 = vld [vmem:[%s1737 + $0x4] sm:$0xf]
        %v1740 = vld [vmem:[%s1737 + $0x8] sm:$0xf]
        %v1741 = vld [vmem:[%s1737 + $0xc] sm:$0xf]
        %v1742 = vld [vmem:[%s1737 + $0x10] sm:$0xf]
        %v1743 = vld [vmem:[%s1737 + $0x14] sm:$0xf]
        %v1744 = vld [vmem:[%s1737 + $0x18] sm:$0xf]
        %v1745 = vld [vmem:[%s1737 + $0x1c] sm:$0xf]
        %v1746 = vld [vmem:[%s1737 + $0x20] sm:$0xf]
        %v1747 = vld [vmem:[%s1737 + $0x24] sm:$0xf]
        %v1748 = vld [vmem:[%s1737 + $0x28] sm:$0xf]
        %v1749 = vld [vmem:[%s1737 + $0x2c] sm:$0xf]
        %v1750 = vld [vmem:[%s1737 + $0x30] sm:$0xf]
        %v1751 = vld [vmem:[%s1737 + $0x34] sm:$0xf]
        %v1752 = vld [vmem:[%s1737 + $0x38] sm:$0xf]
        %v1753 = vld [vmem:[%s1737 + $0x3c] sm:$0xf]
        %v1754 = vld [vmem:[%s1737 + $0x40] sm:$0xf]
        %v1755 = vld [vmem:[%s1737 + $0x44] sm:$0xf]
        %v1756 = vld [vmem:[%s1737 + $0x48] sm:$0xf]
        %v1757 = vld [vmem:[%s1737 + $0x4c] sm:$0xf]
        %v1758 = vld [vmem:[%s1737 + $0x50] sm:$0xf]
        %v1759 = vld [vmem:[%s1737 + $0x54] sm:$0xf]
        %v1760 = vld [vmem:[%s1737 + $0x58] sm:$0xf]
        %v1761 = vld [vmem:[%s1737 + $0x5c] sm:$0xf]
        %v1762 = vunpack.c.l.bf16 %v1738
        %v1763 = vunpack.c.l.bf16 %v1739
        %v1764 = vunpack.c.l.bf16 %v1740
        %v1765 = vunpack.c.l.bf16 %v1741
        %v1766 = vunpack.c.l.bf16 %v1742
        %v1767 = vunpack.c.l.bf16 %v1743
        %v1768 = vunpack.c.l.bf16 %v1744
        %v1769 = vunpack.c.l.bf16 %v1745
        %v1770 = vunpack.c.l.bf16 %v1746
        %v1771 = vunpack.c.l.bf16 %v1747
        %v1772 = vunpack.c.l.bf16 %v1748
        %v1773 = vunpack.c.l.bf16 %v1749
        %v1774 = vunpack.c.l.bf16 %v1750
        %v1775 = vunpack.c.l.bf16 %v1751
        %v1776 = vunpack.c.l.bf16 %v1752
        %v1777 = vunpack.c.l.bf16 %v1753
        %v1778 = vunpack.c.l.bf16 %v1754
        %v1779 = vunpack.c.l.bf16 %v1755
        %v1780 = vunpack.c.l.bf16 %v1756
        %v1781 = vunpack.c.l.bf16 %v1757
        %v1782 = vunpack.c.l.bf16 %v1758
        %v1783 = vunpack.c.l.bf16 %v1759
        %v1784 = vunpack.c.l.bf16 %v1760
        %v1785 = vunpack.c.l.bf16 %v1761
        %v1786 = vmul.f32 %v306, %v1762
        %v1787 = vmul.f32 %v307, %v1763
        %v1788 = vmul.f32 %v308, %v1764
        %v1789 = vmul.f32 %v309, %v1765
        %v1790 = vmul.f32 %v310, %v1766
        %v1791 = vmul.f32 %v311, %v1767
        %v1792 = vmul.f32 %v312, %v1768
        %v1793 = vmul.f32 %v313, %v1769
        %v1794 = vmul.f32 %v314, %v1770
        %v1795 = vmul.f32 %v315, %v1771
        %v1796 = vmul.f32 %v316, %v1772
        %v1797 = vmul.f32 %v317, %v1773
        %v1798 = vmul.f32 %v318, %v1774
        %v1799 = vmul.f32 %v319, %v1775
        %v1800 = vmul.f32 %v320, %v1776
        %v1801 = vmul.f32 %v321, %v1777
        %v1802 = vmul.f32 %v322, %v1778
        %v1803 = vmul.f32 %v323, %v1779
        %v1804 = vmul.f32 %v324, %v1780
        %v1805 = vmul.f32 %v325, %v1781
        %v1806 = vmul.f32 %v326, %v1782
        %v1807 = vmul.f32 %v327, %v1783
        %v1808 = vmul.f32 %v328, %v1784
        %v1809 = vmul.f32 %v329, %v1785
        %v1810 = vadd.f32 %v1786, %v1787
        %v1811 = vadd.f32 %v1810, %v1788
        %v1812 = vadd.f32 %v1811, %v1789
        %v1813 = vadd.f32 %v1812, %v1790
        %v1814 = vadd.f32 %v1813, %v1791
        %v1815 = vadd.f32 %v1814, %v1792
        %v1816 = vadd.f32 %v1815, %v1793
        %v1817 = vadd.f32 %v1816, %v1794
        %v1818 = vadd.f32 %v1817, %v1795
        %v1819 = vadd.f32 %v1818, %v1796
        %v1820 = vadd.f32 %v1819, %v1797
        %v1821 = vadd.f32 %v1820, %v1798
        %v1822 = vadd.f32 %v1821, %v1799
        %v1823 = vadd.f32 %v1822, %v1800
        %v1824 = vadd.f32 %v1823, %v1801
        %v1825 = vadd.f32 %v1824, %v1802
        %v1826 = vadd.f32 %v1825, %v1803
        %v1827 = vadd.f32 %v1826, %v1804
        %v1828 = vadd.f32 %v1827, %v1805
        %v1829 = vadd.f32 %v1828, %v1806
        %v1830 = vadd.f32 %v1829, %v1807
        %v1831 = vadd.f32 %v1830, %v1808
        %v1832 = vadd.f32 %v1831, %v1809
        %v1833 = vrot.slane %v1832, 4
        %v1834 = vadd.f32 %v1832, %v1833
        %v1835 = vrot.slane %v1834, 2
        %v1836 = vadd.f32 %v1834, %v1835
        %v1837 = vrot.slane %v1836, 1
        %v1838 = vadd.f32 %v1836, %v1837
        %1839 = vadd.xlane.f32.xlu0 %v1838
        %v1840 = vpop.xlane.xlu0 %1839
        %v1841 = vmul.f32 %v386, %v1762
        %v1842 = vmul.f32 %v387, %v1763
        %v1843 = vmul.f32 %v388, %v1764
        %v1844 = vmul.f32 %v389, %v1765
        %v1845 = vmul.f32 %v390, %v1766
        %v1846 = vmul.f32 %v391, %v1767
        %v1847 = vmul.f32 %v392, %v1768
        %v1848 = vmul.f32 %v393, %v1769
        %v1849 = vmul.f32 %v394, %v1770
        %v1850 = vmul.f32 %v395, %v1771
        %v1851 = vmul.f32 %v396, %v1772
        %v1852 = vmul.f32 %v397, %v1773
        %v1853 = vmul.f32 %v398, %v1774
        %v1854 = vmul.f32 %v399, %v1775
        %v1855 = vmul.f32 %v400, %v1776
        %v1856 = vmul.f32 %v401, %v1777
        %v1857 = vmul.f32 %v402, %v1778
        %v1858 = vmul.f32 %v403, %v1779
        %v1859 = vmul.f32 %v404, %v1780
        %v1860 = vmul.f32 %v405, %v1781
        %v1861 = vmul.f32 %v406, %v1782
        %v1862 = vmul.f32 %v407, %v1783
        %v1863 = vmul.f32 %v408, %v1784
        %v1864 = vmul.f32 %v409, %v1785
        %v1865 = vadd.f32 %v1841, %v1842
        %v1866 = vadd.f32 %v1865, %v1843
        %v1867 = vadd.f32 %v1866, %v1844
        %v1868 = vadd.f32 %v1867, %v1845
        %v1869 = vadd.f32 %v1868, %v1846
        %v1870 = vadd.f32 %v1869, %v1847
        %v1871 = vadd.f32 %v1870, %v1848
        %v1872 = vadd.f32 %v1871, %v1849
        %v1873 = vadd.f32 %v1872, %v1850
        %v1874 = vadd.f32 %v1873, %v1851
        %v1875 = vadd.f32 %v1874, %v1852
        %v1876 = vadd.f32 %v1875, %v1853
        %v1877 = vadd.f32 %v1876, %v1854
        %v1878 = vadd.f32 %v1877, %v1855
        %v1879 = vadd.f32 %v1878, %v1856
        %v1880 = vadd.f32 %v1879, %v1857
        %v1881 = vadd.f32 %v1880, %v1858
        %v1882 = vadd.f32 %v1881, %v1859
        %v1883 = vadd.f32 %v1882, %v1860
        %v1884 = vadd.f32 %v1883, %v1861
        %v1885 = vadd.f32 %v1884, %v1862
        %v1886 = vadd.f32 %v1885, %v1863
        %v1887 = vadd.f32 %v1886, %v1864
        %v1888 = vrot.slane %v1887, 4
        %v1889 = vadd.f32 %v1887, %v1888
        %v1890 = vrot.slane %v1889, 2
        %v1891 = vadd.f32 %v1889, %v1890
        %v1892 = vrot.slane %v1891, 1
        %v1893 = vadd.f32 %v1891, %v1892
        %1894 = vadd.xlane.f32.xlu0 %v1893
        %v1895 = vpop.xlane.xlu0 %1894
        %vm1896 = vcmask 7168
        %v1897 = vsel %vm1896, %v384, %v568
        %vm1898 = vcmask 15360
        %v1899 = vsel %vm1898, %v1897, %v727
        %vm1900 = vcmask 23552
        %v1901 = vsel %vm1900, %v1899, %v886
        %vm1902 = vcmask 31744
        %v1903 = vsel %vm1902, %v1901, %v1045
        %vm1904 = vcmask 39936
        %v1905 = vsel %vm1904, %v1903, %v1204
        %vm1906 = vcmask 48128
        %v1907 = vsel %vm1906, %v1905, %v1363
        %vm1908 = vcmask 56320
        %v1909 = vsel %vm1908, %v1907, %v1522
        %vm1910 = vcmask 64512
        %v1911 = vsel %vm1910, %v1909, %v1681
        %vm1912 = vcmask 72704
        %v1913 = vsel %vm1912, %v1911, %v1840
        %v1914 = vsel %vm1896, %v464, %v623
        %v1915 = vsel %vm1898, %v1914, %v782
        %v1916 = vsel %vm1900, %v1915, %v941
        %v1917 = vsel %vm1902, %v1916, %v1100
        %v1918 = vsel %vm1904, %v1917, %v1259
        %v1919 = vsel %vm1906, %v1918, %v1418
        %v1920 = vsel %vm1908, %v1919, %v1577
        %v1921 = vsel %vm1910, %v1920, %v1736
        %v1922 = vsel %vm1912, %v1921, %v1895
        %v1924 = vrot.slane %v1922, 7
        %vm1926 = vcmask 1040384
        %v1927 = vsel %vm1926, %v1913, %v1924
        %vm1928 = vcmask 74752
        %1929 = vst.msk [vmem:[%s255] sm:$0x3] %vm1928, %v1927
        %s1930 = sand.u32 %s82, 1
        %s1931 = scalar_lea.sflag [#allocation4], %s1930
        %s1932 = sand.u32 %s82, 1
        %s1933 = smul.addr %s1932, 2
        %s1934 = scalar_lea.vmem [#allocation7], %s1933
        // Predicated region
        $region37: #{tpu_custom_call.1} parent=27 // pred_check
          %p1935 = pneg %p92
        $region38: #{tpu_custom_call.1} parent=27 // pred_check_branch
          %1937 = sbr.rel (%p1935) target = $region40
        $region39: #{tpu_custom_call.1} parent=27 // pred_region
          %1939 = vsyncadd %s1931, 0
          %s1940 = smul.addr %s22, 2
          %s1941 = scalar_lea.hbm %s2, %s1940
          %s1943 = sshll.u32 %s1934, 4
          %s1944 = int_to_ptr.vmem [resolvable:$true] %s1943
          %s1945 = sshll.u32 %s1941, 4
          %s1946 = int_to_ptr.hbm [resolvable:$true] %s1945
          %1948 = dma.vmem_to_hbm [thread:$0]  %s1944, 32, %s1946, %s1931
        $region40: #{tpu_custom_call.1} parent=27 // pred_fallthru
          _
      $region28: #{tpu_custom_call.1} parent=5 // pred_fallthru
        _
      %p1949 = scmp.le.s32.totalorder 2, %s17
      // Predicated region
      $region41: #{tpu_custom_call.1} parent=5 // pred_check
        %p1950 = pneg %p1949
      $region42: #{tpu_custom_call.1} parent=5 // pred_check_branch
        %1952 = sbr.rel (%p1950) target = $region44
      $region43: #{tpu_custom_call.1} parent=5 // pred_region
        %s1953 = ssub.s32 %s17, 2
        // Predicated region
        $region45: #{tpu_custom_call.1} parent=43 // pred_check
          %p1954 = pneg %p98
        $region46: #{tpu_custom_call.1} parent=43 // pred_check_branch
          %1956 = sbr.rel (%p1954) target = $region48
        $region47: #{tpu_custom_call.1} parent=43 // pred_region
          %s1957 = sand.u32 %s83, 1
          %s1958 = scalar_lea.sflag [#allocation4], %s1957
          %s1959 = sand.u32 %s83, 1
          %s1960 = smul.addr %s1959, 2
          %s1961 = scalar_lea.vmem [#allocation7], %s1960
          %1963 = dma.done %s1958, 32
        $region48: #{tpu_custom_call.1} parent=43 // pred_fallthru
          _
      $region44: #{tpu_custom_call.1} parent=5 // pred_fallthru
        _
    $region6: #{tpu_custom_call.1} parent=1 // loop_footer
      %s21 = sadd.s32 1, %s17
    $region7: #{tpu_custom_call.1} parent=1 // loop_footer_branch
      %16 = sbr.rel target = $region3
    $region8: #{tpu_custom_call.1} parent=1 // loop_exit
      _
    %1964 = vsyncpa [#allocation3], 1
    %s1965 = scalar_lea.sflag [#allocation3], 1
    %1966 = vsyncpa %s1965, 1
    %1967 = vsyncpa [#allocation6], 1
    %s1968 = scalar_lea.sflag [#allocation6], 1
    %1969 = vsyncpa %s1968, 1
    %1970 = vsyncpa [#allocation4], 1
    %s1971 = scalar_lea.sflag [#allocation4], 1
    %1972 = vsyncpa %s1971, 1

</llo_original>
